<compile_context>
chip_gen: v7x
topology: tpu7x:2x2x1
jax: 0.10.0
libtpu: 0.0.40
codegen_flags: <defaults>
</compile_context>

<pallas_src>
import jax
import jax.numpy as jnp
from jax.experimental import pallas as pl
from jax.experimental.pallas import tpu as pltpu


def _round_up(x, m):
    return (x + m - 1) // m * m


# ---------------- Pallas kernels (the hot path) ----------------

def _conv_relu_pool_kernel(cols_ref, w_ref, b_ref, o_ref):
    # cols_ref: (TM, K)   w_ref: (K, Cout)   b_ref: (1, Cout)   o_ref: (TM, Cout)
    # grid = (m_tiles, 4); axis 1 = pool offsets (reduction, output resident).
    p = pl.program_id(1)
    y = jnp.dot(cols_ref[...], w_ref[...], preferred_element_type=jnp.float32)

    @pl.when(p == 0)
    def _init():
        o_ref[...] = y

    @pl.when(p > 0)
    def _accumulate():
        o_ref[...] = jnp.maximum(o_ref[...], y)          # 2x2 max-pool

    @pl.when(p == pl.num_programs(1) - 1)
    def _finalize():
        # bias + ReLU hoisted out of the pool loop (exactly equivalent).
        o_ref[...] = jnp.maximum(o_ref[...] + b_ref[...], 0.0)


def _linear_kernel(x_ref, w_ref, b_ref, o_ref):
    o_ref[...] = (
        jnp.dot(x_ref[...], w_ref[...], preferred_element_type=jnp.float32)
        + b_ref[...]
    )


def conv_relu_pool(cols, w, b, tm=512):
    """cols: (P, M, K) pooled-im2col, w: (K, Cout), b: (1, Cout) -> (M, Cout)."""
    P, M, K = cols.shape
    cout = w.shape[1]
    tm = min(tm, _round_up(M, 8))          # small-batch friendly tile
    m_pad = _round_up(M, tm)
    if m_pad != M:                          # handle M % TM remainder
        cols = jnp.pad(cols, ((0, 0), (0, m_pad - M), (0, 0)))
    out = pl.pallas_call(
        _conv_relu_pool_kernel,
        out_shape=jax.ShapeDtypeStruct((m_pad, cout), jnp.float32),
        grid=(m_pad // tm, P),
        in_specs=[
            pl.BlockSpec((None, tm, K), lambda i, p: (p, i, 0)),   # cols tile
            pl.BlockSpec((K, cout), lambda i, p: (0, 0)),          # weights
            pl.BlockSpec((1, cout), lambda i, p: (0, 0)),          # bias
        ],
        out_specs=pl.BlockSpec((tm, cout), lambda i, p: (i, 0)),   # resident over p
        compiler_params=pltpu.CompilerParams(
            dimension_semantics=("parallel", "arbitrary"),
            vmem_limit_bytes=32 * 1024 * 1024,
        ),
    )(cols, w, b)
    return out[:M] if m_pad != M else out


def linear(x, w, b):
    """x: (B, K), w: (K, Npad) lane-padded, b: (1, Npad) -> (B, Npad)."""
    return pl.pallas_call(
        _linear_kernel,
        out_shape=jax.ShapeDtypeStruct((x.shape[0], w.shape[1]), jnp.float32),
        in_specs=[pl.BlockSpec(memory_space=pltpu.MemorySpace.VMEM)] * 3,
        out_specs=pl.BlockSpec(memory_space=pltpu.MemorySpace.VMEM),
        compiler_params=pltpu.CompilerParams(vmem_limit_bytes=32 * 1024 * 1024),
    )(x, w, b)


# ---------------- JAX glue (layout only, no arithmetic) ----------------

def im2col_pooled(x_nhwc, ksize=5, pad=2, pool=2):
    """(B,H,W,Cin) -> (pool*pool, B*Hp*Wp, ksize*ksize*Cin) pooled im2col."""
    B, H, W, Cin = x_nhwc.shape
    Hp, Wp = H // pool, W // pool
    xp = jnp.pad(x_nhwc, ((0, 0), (pad, pad), (pad, pad), (0, 0)))
    groups = []
    for di in range(pool):
        for dj in range(pool):
            taps = []
            for kh in range(ksize):
                for kw in range(ksize):
                    sl = xp[:,
                            di + kh: di + kh + pool * Hp: pool,
                            dj + kw: dj + kw + pool * Wp: pool, :]
                    taps.append(sl)                          # (B, Hp, Wp, Cin)
            t = jnp.stack(taps, axis=3)                      # (B, Hp, Wp, k*k, Cin)
            groups.append(t.reshape(B * Hp * Wp, ksize * ksize * Cin))
    return jnp.stack(groups, axis=0)


def init_params(key):
    """Synthetic params in torch-equivalent layouts: conv weights HWIO
    (== torch weight.transpose(2,3,1,0)), linear weight (in,out) with rows in
    torch NCHW-flatten order (== torch weight.T), biases (1,out)."""
    k1, k2, k3, k4, k5, k6 = jax.random.split(key, 6)
    w1 = jax.random.normal(k1, (5, 5, 1, 16), jnp.float32) * 0.1
    b1 = jax.random.normal(k2, (1, 16), jnp.float32) * 0.1
    w2 = jax.random.normal(k3, (5, 5, 16, 32), jnp.float32) * 0.05
    b2 = jax.random.normal(k4, (1, 32), jnp.float32) * 0.05
    w3 = jax.random.normal(k5, (32 * 7 * 7, 10), jnp.float32) * 0.02
    b3 = jax.random.normal(k6, (1, 10), jnp.float32) * 0.02
    return (w1, b1, w2, b2, w3, b3)


def prepare_params(params):
    """One-time re-layout for the kernels (outside the hot path)."""
    w1, b1, w2, b2, w3, b3 = params
    w1r = w1.reshape(5 * 5 * 1, 16)
    w2r = w2.reshape(5 * 5 * 16, 32)
    # Permute w3 rows from torch NCHW-flatten order (c*49+hw) to NHWC-flatten
    # order (hw*32+c) so the conv2 output flattens with a plain reshape.
    w3_nhwc = w3.reshape(32, 7 * 7, 10).transpose(1, 0, 2).reshape(32 * 7 * 7, 10)
    # Lane-pad tiny N=10 to 128 for unmasked stores; slice back after the GEMM.
    w3p = jnp.pad(w3_nhwc, ((0, 0), (0, 128 - 10)))
    b3p = jnp.pad(b3, ((0, 0), (0, 128 - 10)))
    return (w1r, b1, w2r, b2, w3p, b3p)


@jax.jit
def cnn_forward(x_nchw, prep):
    w1r, b1, w2r, b2, w3p, b3p = prep
    B = x_nchw.shape[0]
    x = jnp.transpose(x_nchw, (0, 2, 3, 1))                  # NCHW -> NHWC
    # conv1(1->16, k5, pad2) + ReLU + maxpool(2)
    cols1 = im2col_pooled(x)                                 # (4, B*14*14, 25)
    y1 = conv_relu_pool(cols1, w1r, b1)                      # (B*196, 16)
    y1 = y1.reshape(B, 14, 14, 16)
    # conv2(16->32, k5, pad2) + ReLU + maxpool(2)
    cols2 = im2col_pooled(y1)                                # (4, B*7*7, 400)
    y2 = conv_relu_pool(cols2, w2r, b2)                      # (B*49, 32)
    # NHWC flatten (no transpose: w3 rows were pre-permuted to match).
    flat = y2.reshape(B, 7 * 7 * 32)                         # (B, 1568)
    out = linear(flat, w3p, b3p)                             # (B, 128)
    return out[:, :10]                                       # (B, 10)


def reference_forward(x_nchw, params):
    """Pure-JAX reference (lax conv / reduce_window), torch semantics."""
    w1, b1, w2, b2, w3, b3 = params
    B = x_nchw.shape[0]
    x = jnp.transpose(x_nchw, (0, 2, 3, 1))

    def block(x, w, b):
        y = jax.lax.conv_general_dilated(
            x, w, window_strides=(1, 1), padding=((2, 2), (2, 2)),
            dimension_numbers=("NHWC", "HWIO", "NHWC"))
        y = jnp.maximum(y + b.reshape(1, 1, 1, -1), 0.0)
        return jax.lax.reduce_window(
            y, -jnp.inf, jax.lax.max, (1, 2, 2, 1), (1, 2, 2, 1), "VALID")

    y = block(block(x, w1, b1), w2, b2)
    flat = jnp.transpose(y, (0, 3, 1, 2)).reshape(B, -1)     # torch .view order
    return flat @ w3 + b3


if __name__ == "__main__":
    key = jax.random.PRNGKey(0)
    kx, kp = jax.random.split(key)
    # MNIST-shaped NCHW input implied by the Linear(32*7*7, 10) layer.
    x = jax.random.normal(kx, (2, 1, 28, 28), jnp.float32)
    params = init_params(kp)
    prep = prepare_params(params)

    out = cnn_forward(x, prep)
    out = jax.block_until_ready(out)

    ref = reference_forward(x, params)
    assert out.shape == (2, 10), out.shape
    assert jnp.allclose(out, ref, rtol=1e-4, atol=1e-4), (out, ref)
    print("KERNEL_OK")
</pallas_src>

<mosaic_0001>
module attributes {stable_mosaic.version = 11 : i64} {
  func.func @_conv_relu_pool_kernel(%arg0: i32, %arg1: i32, %arg2: memref<1x392x25xf32, #tpu.memory_space<vmem>>, %arg3: memref<25x16xf32, #tpu.memory_space<vmem>>, %arg4: memref<1x16xf32, #tpu.memory_space<vmem>>, %arg5: memref<392x16xf32, #tpu.memory_space<vmem>>) attributes {dimension_semantics = [#tpu.dimension_semantics<parallel>, #tpu.dimension_semantics<arbitrary>], iteration_bounds = array<i64: 1, 4>, scalar_prefetch = 0 : i64, scratch_operands = 0 : i64, tpu.core_type = #tpu.core_type<tc>, window_params = [{transform_indices = @transform_0, window_bounds = array<i64: 1, 392, 25>}, {pipeline_mode = #tpu.pipeline_mode<synchronous>, transform_indices = @transform_1, window_bounds = array<i64: 25, 16>}, {pipeline_mode = #tpu.pipeline_mode<synchronous>, transform_indices = @transform_2, window_bounds = array<i64: 1, 16>}, {transform_indices = @transform_3, window_bounds = array<i64: 392, 16>}]} {
    %c0 = arith.constant 0 : index
    %c0_0 = arith.constant 0 : index
    %c0_1 = arith.constant 0 : index
    %0 = vector.load %arg2[%c0, %c0_0, %c0_1] : memref<1x392x25xf32, #tpu.memory_space<vmem>>, vector<1x392x25xf32>
    %1 = vector.shape_cast %0 : vector<1x392x25xf32> to vector<392x25xf32>
    %c0_2 = arith.constant 0 : index
    %c0_3 = arith.constant 0 : index
    %2 = vector.load %arg3[%c0_2, %c0_3] : memref<25x16xf32, #tpu.memory_space<vmem>>, vector<25x16xf32>
    %cst = arith.constant dense<0.000000e+00> : vector<392x16xf32>
    %3 = tpu.matmul %1, %2, %cst {dimension_numbers = #tpu.dot_dimension_numbers<[1], [0], [0], [1], [0, 0, 1, 1], [], []>} : vector<392x25xf32>, vector<25x16xf32>, vector<392x16xf32> -> vector<392x16xf32>
    %c0_i32 = arith.constant 0 : i32
    %4 = arith.cmpi eq, %arg1, %c0_i32 : i32
    %5 = arith.extui %4 : i1 to i32
    %c0_i32_4 = arith.constant 0 : i32
    %6 = arith.cmpi ne, %5, %c0_i32_4 : i32
    scf.if %6 {
      %c0_8 = arith.constant 0 : index
      %c0_9 = arith.constant 0 : index
      %13 = vector.load %arg5[%c0_8, %c0_9] : memref<392x16xf32, #tpu.memory_space<vmem>>, vector<392x16xf32>
      tpu.vector_store %arg5[%c0_8, %c0_9], %3 {strides = array<i32>} : memref<392x16xf32, #tpu.memory_space<vmem>>, vector<392x16xf32>,
    } else {
    }
    %c0_i32_5 = arith.constant 0 : i32
    %7 = arith.cmpi sgt, %arg1, %c0_i32_5 : i32
    %8 = arith.extui %7 : i1 to i32
    %c0_i32_6 = arith.constant 0 : i32
    %9 = arith.cmpi ne, %8, %c0_i32_6 : i32
    scf.if %9 {
      %c0_8 = arith.constant 0 : index
      %c0_9 = arith.constant 0 : index
      %13 = vector.load %arg5[%c0_8, %c0_9] : memref<392x16xf32, #tpu.memory_space<vmem>>, vector<392x16xf32>
      %14 = arith.maximumf %13, %3 : vector<392x16xf32>
      %c0_10 = arith.constant 0 : index
      %c0_11 = arith.constant 0 : index
      %15 = vector.load %arg5[%c0_10, %c0_11] : memref<392x16xf32, #tpu.memory_space<vmem>>, vector<392x16xf32>
      tpu.vector_store %arg5[%c0_10, %c0_11], %14 {strides = array<i32>} : memref<392x16xf32, #tpu.memory_space<vmem>>, vector<392x16xf32>,
    } else {
    }
    %c3_i32 = arith.constant 3 : i32
    %10 = arith.cmpi eq, %arg1, %c3_i32 : i32
    %11 = arith.extui %10 : i1 to i32
    %c0_i32_7 = arith.constant 0 : i32
    %12 = arith.cmpi ne, %11, %c0_i32_7 : i32
    scf.if %12 {
      %c0_8 = arith.constant 0 : index
      %c0_9 = arith.constant 0 : index
      %13 = vector.load %arg5[%c0_8, %c0_9] : memref<392x16xf32, #tpu.memory_space<vmem>>, vector<392x16xf32>
      %c0_10 = arith.constant 0 : index
      %c0_11 = arith.constant 0 : index
      %14 = vector.load %arg4[%c0_10, %c0_11] : memref<1x16xf32, #tpu.memory_space<vmem>>, vector<1x16xf32>
      %15 = vector.broadcast %14 : vector<1x16xf32> to vector<392x16xf32>
      %16 = arith.addf %13, %15 : vector<392x16xf32>
      %cst_12 = arith.constant 0.000000e+00 : f32
      %17 = vector.broadcast %cst_12 : f32 to vector<392x16xf32>
      %18 = arith.maximumf %16, %17 : vector<392x16xf32>
      %c0_13 = arith.constant 0 : index
      %c0_14 = arith.constant 0 : index
      %19 = vector.load %arg5[%c0_13, %c0_14] : memref<392x16xf32, #tpu.memory_space<vmem>>, vector<392x16xf32>
      tpu.vector_store %arg5[%c0_13, %c0_14], %18 {strides = array<i32>} : memref<392x16xf32, #tpu.memory_space<vmem>>, vector<392x16xf32>,
    } else {
    }
    return
  }
  func.func @transform_0(%arg0: i32, %arg1: i32) -> (i32, i32, i32) {
    %c0_i32 = arith.constant 0 : i32
    %c0_i32_0 = arith.constant 0 : i32
    return %arg1, %arg0, %c0_i32 : i32, i32, i32
  }
  func.func @transform_1(%arg0: i32, %arg1: i32) -> (i32, i32) {
    %c0_i32 = arith.constant 0 : i32
    %c0_i32_0 = arith.constant 0 : i32
    %c0_i32_1 = arith.constant 0 : i32
    return %c0_i32, %c0_i32_0 : i32, i32
  }
  func.func @transform_2(%arg0: i32, %arg1: i32) -> (i32, i32) {
    %c0_i32 = arith.constant 0 : i32
    %c0_i32_0 = arith.constant 0 : i32
    %c0_i32_1 = arith.constant 0 : i32
    return %c0_i32, %c0_i32_0 : i32, i32
  }
  func.func @transform_3(%arg0: i32, %arg1: i32) -> (i32, i32) {
    %c0_i32 = arith.constant 0 : i32
    %c0_i32_0 = arith.constant 0 : i32
    return %arg0, %c0_i32 : i32, i32
  }
}

module attributes {stable_mosaic.version = 11 : i64} {
  func.func @_conv_relu_pool_kernel(%arg0: i32, %arg1: i32, %arg2: memref<1x104x400xf32, #tpu.memory_space<vmem>>, %arg3: memref<400x32xf32, #tpu.memory_space<vmem>>, %arg4: memref<1x32xf32, #tpu.memory_space<vmem>>, %arg5: memref<104x32xf32, #tpu.memory_space<vmem>>) attributes {dimension_semantics = [#tpu.dimension_semantics<parallel>, #tpu.dimension_semantics<arbitrary>], iteration_bounds = array<i64: 1, 4>, scalar_prefetch = 0 : i64, scratch_operands = 0 : i64, tpu.core_type = #tpu.core_type<tc>, window_params = [{transform_indices = @transform_0, window_bounds = array<i64: 1, 104, 400>}, {pipeline_mode = #tpu.pipeline_mode<synchronous>, transform_indices = @transform_1, window_bounds = array<i64: 400, 32>}, {pipeline_mode = #tpu.pipeline_mode<synchronous>, transform_indices = @transform_2, window_bounds = array<i64: 1, 32>}, {transform_indices = @transform_3, window_bounds = array<i64: 104, 32>}]} {
    %c0 = arith.constant 0 : index
    %c0_0 = arith.constant 0 : index
    %c0_1 = arith.constant 0 : index
    %0 = vector.load %arg2[%c0, %c0_0, %c0_1] : memref<1x104x400xf32, #tpu.memory_space<vmem>>, vector<1x104x400xf32>
    %1 = vector.shape_cast %0 : vector<1x104x400xf32> to vector<104x400xf32>
    %c0_2 = arith.constant 0 : index
    %c0_3 = arith.constant 0 : index
    %2 = vector.load %arg3[%c0_2, %c0_3] : memref<400x32xf32, #tpu.memory_space<vmem>>, vector<400x32xf32>
    %cst = arith.constant dense<0.000000e+00> : vector<104x32xf32>
    %3 = tpu.matmul %1, %2, %cst {dimension_numbers = #tpu.dot_dimension_numbers<[1], [0], [0], [1], [0, 0, 1, 1], [], []>} : vector<104x400xf32>, vector<400x32xf32>, vector<104x32xf32> -> vector<104x32xf32>
    %c0_i32 = arith.constant 0 : i32
    %4 = arith.cmpi eq, %arg1, %c0_i32 : i32
    %5 = arith.extui %4 : i1 to i32
    %c0_i32_4 = arith.constant 0 : i32
    %6 = arith.cmpi ne, %5, %c0_i32_4 : i32
    scf.if %6 {
      %c0_8 = arith.constant 0 : index
      %c0_9 = arith.constant 0 : index
      %13 = vector.load %arg5[%c0_8, %c0_9] : memref<104x32xf32, #tpu.memory_space<vmem>>, vector<104x32xf32>
      tpu.vector_store %arg5[%c0_8, %c0_9], %3 {strides = array<i32>} : memref<104x32xf32, #tpu.memory_space<vmem>>, vector<104x32xf32>,
    } else {
    }
    %c0_i32_5 = arith.constant 0 : i32
    %7 = arith.cmpi sgt, %arg1, %c0_i32_5 : i32
    %8 = arith.extui %7 : i1 to i32
    %c0_i32_6 = arith.constant 0 : i32
    %9 = arith.cmpi ne, %8, %c0_i32_6 : i32
    scf.if %9 {
      %c0_8 = arith.constant 0 : index
      %c0_9 = arith.constant 0 : index
      %13 = vector.load %arg5[%c0_8, %c0_9] : memref<104x32xf32, #tpu.memory_space<vmem>>, vector<104x32xf32>
      %14 = arith.maximumf %13, %3 : vector<104x32xf32>
      %c0_10 = arith.constant 0 : index
      %c0_11 = arith.constant 0 : index
      %15 = vector.load %arg5[%c0_10, %c0_11] : memref<104x32xf32, #tpu.memory_space<vmem>>, vector<104x32xf32>
      tpu.vector_store %arg5[%c0_10, %c0_11], %14 {strides = array<i32>} : memref<104x32xf32, #tpu.memory_space<vmem>>, vector<104x32xf32>,
    } else {
    }
    %c3_i32 = arith.constant 3 : i32
    %10 = arith.cmpi eq, %arg1, %c3_i32 : i32
    %11 = arith.extui %10 : i1 to i32
    %c0_i32_7 = arith.constant 0 : i32
    %12 = arith.cmpi ne, %11, %c0_i32_7 : i32
    scf.if %12 {
      %c0_8 = arith.constant 0 : index
      %c0_9 = arith.constant 0 : index
      %13 = vector.load %arg5[%c0_8, %c0_9] : memref<104x32xf32, #tpu.memory_space<vmem>>, vector<104x32xf32>
      %c0_10 = arith.constant 0 : index
      %c0_11 = arith.constant 0 : index
      %14 = vector.load %arg4[%c0_10, %c0_11] : memref<1x32xf32, #tpu.memory_space<vmem>>, vector<1x32xf32>
      %15 = vector.broadcast %14 : vector<1x32xf32> to vector<104x32xf32>
      %16 = arith.addf %13, %15 : vector<104x32xf32>
      %cst_12 = arith.constant 0.000000e+00 : f32
      %17 = vector.broadcast %cst_12 : f32 to vector<104x32xf32>
      %18 = arith.maximumf %16, %17 : vector<104x32xf32>
      %c0_13 = arith.constant 0 : index
      %c0_14 = arith.constant 0 : index
      %19 = vector.load %arg5[%c0_13, %c0_14] : memref<104x32xf32, #tpu.memory_space<vmem>>, vector<104x32xf32>
      tpu.vector_store %arg5[%c0_13, %c0_14], %18 {strides = array<i32>} : memref<104x32xf32, #tpu.memory_space<vmem>>, vector<104x32xf32>,
    } else {
    }
    return
  }
  func.func @transform_0(%arg0: i32, %arg1: i32) -> (i32, i32, i32) {
    %c0_i32 = arith.constant 0 : i32
    %c0_i32_0 = arith.constant 0 : i32
    return %arg1, %arg0, %c0_i32 : i32, i32, i32
  }
  func.func @transform_1(%arg0: i32, %arg1: i32) -> (i32, i32) {
    %c0_i32 = arith.constant 0 : i32
    %c0_i32_0 = arith.constant 0 : i32
    %c0_i32_1 = arith.constant 0 : i32
    return %c0_i32, %c0_i32_0 : i32, i32
  }
  func.func @transform_2(%arg0: i32, %arg1: i32) -> (i32, i32) {
    %c0_i32 = arith.constant 0 : i32
    %c0_i32_0 = arith.constant 0 : i32
    %c0_i32_1 = arith.constant 0 : i32
    return %c0_i32, %c0_i32_0 : i32, i32
  }
  func.func @transform_3(%arg0: i32, %arg1: i32) -> (i32, i32) {
    %c0_i32 = arith.constant 0 : i32
    %c0_i32_0 = arith.constant 0 : i32
    return %arg0, %c0_i32 : i32, i32
  }
}

module attributes {stable_mosaic.version = 11 : i64} {
  func.func @_linear_kernel(%arg0: memref<2x1568xf32, #tpu.memory_space<vmem>>, %arg1: memref<1568x128xf32, #tpu.memory_space<vmem>>, %arg2: memref<1x128xf32, #tpu.memory_space<vmem>>, %arg3: memref<2x128xf32, #tpu.memory_space<vmem>>) attributes {dimension_semantics = [], scalar_prefetch = 0 : i64, scratch_operands = 0 : i64, tpu.core_type = #tpu.core_type<tc>} {
    %c0 = arith.constant 0 : index
    %c0_0 = arith.constant 0 : index
    %0 = vector.load %arg0[%c0, %c0_0] : memref<2x1568xf32, #tpu.memory_space<vmem>>, vector<2x1568xf32>
    %c0_1 = arith.constant 0 : index
    %c0_2 = arith.constant 0 : index
    %1 = vector.load %arg1[%c0_1, %c0_2] : memref<1568x128xf32, #tpu.memory_space<vmem>>, vector<1568x128xf32>
    %cst = arith.constant dense<0.000000e+00> : vector<2x128xf32>
    %2 = tpu.matmul %0, %1, %cst {dimension_numbers = #tpu.dot_dimension_numbers<[1], [0], [0], [1], [0, 0, 1, 1], [], []>} : vector<2x1568xf32>, vector<1568x128xf32>, vector<2x128xf32> -> vector<2x128xf32>
    %c0_3 = arith.constant 0 : index
    %c0_4 = arith.constant 0 : index
    %3 = vector.load %arg2[%c0_3, %c0_4] : memref<1x128xf32, #tpu.memory_space<vmem>>, vector<1x128xf32>
    %4 = vector.broadcast %3 : vector<1x128xf32> to vector<2x128xf32>
    %5 = arith.addf %2, %4 : vector<2x128xf32>
    %c0_5 = arith.constant 0 : index
    %c0_6 = arith.constant 0 : index
    %6 = vector.load %arg3[%c0_5, %c0_6] : memref<2x128xf32, #tpu.memory_space<vmem>>, vector<2x128xf32>
    tpu.vector_store %arg3[%c0_5, %c0_6], %5 {strides = array<i32>} : memref<2x128xf32, #tpu.memory_space<vmem>>, vector<2x128xf32>,
    return
  }
}

</mosaic_0001>

<llo_original>
// kernel: cnn_forward.3
$region0: #{cnn_forward.3}
  #allocation0 [shape = 'u32[]', space=smem, size = 0x4, offset = 0x4, fixed_abs, tag = 'smem constant byte address 0x4 - core index']
  #allocation1 [shape = 'u32[144,128]{1,0:T(1,128)}', space=vmem, size = 0x12000, scoped, tag = 'internal scratch']
  %s0 = inlined_call_operand.vmem [shape: f32[4,392,25], index: 0, kind: input, shape index: {}]
  %s1 = inlined_call_operand.vmem [shape: f32[25,16], index: 1, kind: input, shape index: {}]
  %s2 = inlined_call_operand.vmem [shape: f32[1,16], index: 2, kind: input, shape index: {}]
  %s3 = inlined_call_operand.vmem [shape: f32[392,16], index: 3, kind: output, shape index: {}]
  %s4 = sld [smem:[#allocation0]]
  $region57: #{cnn_forward.3} parent=0
    _
  %s6 = ssub.s32 1, %s4
  %s7 = scalar_select 0, %s6, %s4
  loop: start=0, step=1, limit=6
  $region2: #{cnn_forward.3} parent=0 // loop_pre_header
    _
  $region3: #{cnn_forward.3} parent=0 // loop_header
    %s9 = sphi 0, %s13
    %p10 = scmp.ge.s32.totalorder %s9, 6
    %s16 = sphi 0, %s28
    %s17 = sphi 0, %s24
    %s18 = sphi 0, %s16
    %s19 = sphi 0, %s17
    %s20 = sphi 0, %s18
    %s21 = sphi 0, %s19
    %s33 = sphi 0, %s35
    %s36 = sphi 0, %s33
    %s37 = sphi 0, %s36
    %s53 = sphi 0, %s37
    %s57 = sphi 0, %s57
    %s59 = sphi 0, %s57
    %s60 = sphi 0, %s59
    %s74 = sphi 0, %s60
    %s78 = sphi 0, %s78
    %s80 = sphi 0, %s78
    %s81 = sphi 0, %s80
    %s95 = sphi 0, %s81
    %s101 = sphi 0, %s103
    %s104 = sphi 0, %s101
    %s105 = sphi 0, %s104
    %s121 = sphi 0, %s105
  $region4: #{cnn_forward.3} parent=0 // loop_header_branch
    %12 = sbr.rel (%p10) target = $region8
  $region5: #{cnn_forward.3} parent=0 // loop_body
    %s14 = ssub.s32 %s9, 1
    %s15 = ssub.s32 %s9, 2
    %s22 = sadd.s32 1, %s17
    %p23 = scmp.ge.s32.totalorder %s22, 4
    %s24 = scalar_select %p23, 0, %s22
    %s25 = sadd.s32 1, %s16
    %s26 = scalar_select %p23, %s25, %s16
    %p27 = scmp.ge.s32.totalorder %s26, 1
    %s28 = scalar_select %p27, 0, %s26
    %s29 = ssub.s32 %s17, %s24
    %s30 = ssub.s32 %s16, %s28
    %s31 = sor.u32 %s29, %s30
    %p32 = scmp.eq.s32.totalorder %s31, 0
    %s34 = sadd.s32 %s33, 1
    %s35 = scalar_select %p32, %s33, %s34
    %p38 = pneg %p32
    %p39 = scmp.eq.s32.totalorder %s9, 3
    %p40 = por %p38, %p39
    %p41 = scmp.ne.s32.totalorder %s33, %s36
    %p42 = scmp.eq.s32.totalorder %s9, 0
    %p43 = por %p41, %p42
    %p44 = scmp.ne.s32.totalorder %s33, %s36
    %p45 = scmp.eq.s32.totalorder %s14, 3
    %p46 = por %p44, %p45
    %p47 = scmp.ne.s32.totalorder %s36, %s37
    %p48 = scmp.eq.s32.totalorder %s14, 0
    %p49 = por %p47, %p48
    %p50 = scmp.ne.s32.totalorder %s36, %s37
    %p51 = scmp.eq.s32.totalorder %s15, 3
    %p52 = por %p50, %p51
    %p54 = scmp.ne.s32.totalorder %s37, %s53
    %p55 = scmp.eq.s32.totalorder %s15, 0
    %p56 = por %p54, %p55
    %s58 = sadd.s32 %s57, 1
    %p61 = scmp.eq.s32.totalorder %s9, 3
    %p62 = scmp.ne.s32.totalorder %s57, %s59
    %p63 = scmp.eq.s32.totalorder %s9, 0
    %p64 = por %p62, %p63
    %p65 = scmp.ne.s32.totalorder %s57, %s59
    %p66 = scmp.eq.s32.totalorder %s14, 3
    %p67 = por %p65, %p66
    %p68 = scmp.ne.s32.totalorder %s59, %s60
    %p69 = scmp.eq.s32.totalorder %s14, 0
    %p70 = por %p68, %p69
    %p71 = scmp.ne.s32.totalorder %s59, %s60
    %p72 = scmp.eq.s32.totalorder %s15, 3
    %p73 = por %p71, %p72
    %p75 = scmp.ne.s32.totalorder %s60, %s74
    %p76 = scmp.eq.s32.totalorder %s15, 0
    %p77 = por %p75, %p76
    %s79 = sadd.s32 %s78, 1
    %p82 = scmp.eq.s32.totalorder %s9, 3
    %p83 = scmp.ne.s32.totalorder %s78, %s80
    %p84 = scmp.eq.s32.totalorder %s9, 0
    %p85 = por %p83, %p84
    %p86 = scmp.ne.s32.totalorder %s78, %s80
    %p87 = scmp.eq.s32.totalorder %s14, 3
    %p88 = por %p86, %p87
    %p89 = scmp.ne.s32.totalorder %s80, %s81
    %p90 = scmp.eq.s32.totalorder %s14, 0
    %p91 = por %p89, %p90
    %p92 = scmp.ne.s32.totalorder %s80, %s81
    %p93 = scmp.eq.s32.totalorder %s15, 3
    %p94 = por %p92, %p93
    %p96 = scmp.ne.s32.totalorder %s81, %s95
    %p97 = scmp.eq.s32.totalorder %s15, 0
    %p98 = por %p96, %p97
    %s99 = ssub.s32 %s16, %s28
    %p100 = scmp.eq.s32.totalorder %s99, 0
    %s102 = sadd.s32 %s101, 1
    %s103 = scalar_select %p100, %s101, %s102
    %p106 = pneg %p100
    %p107 = scmp.eq.s32.totalorder %s9, 3
    %p108 = por %p106, %p107
    %p109 = scmp.ne.s32.totalorder %s101, %s104
    %p110 = scmp.eq.s32.totalorder %s9, 0
    %p111 = por %p109, %p110
    %p112 = scmp.ne.s32.totalorder %s101, %s104
    %p113 = scmp.eq.s32.totalorder %s14, 3
    %p114 = por %p112, %p113
    %p115 = scmp.ne.s32.totalorder %s104, %s105
    %p116 = scmp.eq.s32.totalorder %s14, 0
    %p117 = por %p115, %p116
    %p118 = scmp.ne.s32.totalorder %s104, %s105
    %p119 = scmp.eq.s32.totalorder %s15, 3
    %p120 = por %p118, %p119
    %p122 = scmp.ne.s32.totalorder %s105, %s121
    %p123 = scmp.eq.s32.totalorder %s15, 0
    %p124 = por %p122, %p123
    %p125 = scmp.le.s32.totalorder 1, %s9
    %p126 = scmp.lt.s32.totalorder %s9, 5
    %p127 = pnand %p125, %p126
    %p128 = pneg %p127
    // Predicated region
    $region9: #{cnn_forward.3} parent=5 // pred_check
      _
    $region10: #{cnn_forward.3} parent=5 // pred_check_branch
      %130 = sbr.rel (%p127) target = $region12
    $region11: #{cnn_forward.3} parent=5 // pred_region
      %s131 = ssub.s32 %s9, 1
      // Predicated region
      $region13: #{cnn_forward.3} parent=11 // pred_check
        %p132 = pneg %p70
      $region14: #{cnn_forward.3} parent=11 // pred_check_branch
        %134 = sbr.rel (%p132) target = $region16
      $region15: #{cnn_forward.3} parent=11 // pred_region
        _
      $region16: #{cnn_forward.3} parent=11 // pred_fallthru
        _
      // Predicated region
      $region17: #{cnn_forward.3} parent=11 // pred_check
        %p135 = pneg %p91
      $region18: #{cnn_forward.3} parent=11 // pred_check_branch
        %137 = sbr.rel (%p135) target = $region20
      $region19: #{cnn_forward.3} parent=11 // pred_region
        _
      $region20: #{cnn_forward.3} parent=11 // pred_fallthru
        _
    $region12: #{cnn_forward.3} parent=5 // pred_fallthru
      _
    %p138 = scmp.lt.s32.totalorder %s9, 4
    // Predicated region
    $region21: #{cnn_forward.3} parent=5 // pred_check
      %p139 = pneg %p138
    $region22: #{cnn_forward.3} parent=5 // pred_check_branch
      %141 = sbr.rel (%p139) target = $region24
    $region23: #{cnn_forward.3} parent=5 // pred_region
      // Predicated region
      $region25: #{cnn_forward.3} parent=23 // pred_check
        %p142 = pneg %p43
      $region26: #{cnn_forward.3} parent=23 // pred_check_branch
        %144 = sbr.rel (%p142) target = $region28
      $region27: #{cnn_forward.3} parent=23 // pred_region
        %s145 = smul.u32 49, %s16
        %p146 = scmp.lt.s32.totalorder %s17, 3
        %s147 = scalar_select %p146, %s17, 3
        %p148 = scmp.lt.s32.totalorder %s145, 48
        %s149 = scalar_select %p148, %s145, 48
        %s150 = smul.addr %s147, 49
        %s151 = sadd.s32 %s149, %s150
        %s152 = smul.addr %s151, 8
        %s153 = scalar_lea.vmem %s0, %s152
        %s154 = smul.u32 49, %s16
      $region28: #{cnn_forward.3} parent=23 // pred_fallthru
        _
    $region24: #{cnn_forward.3} parent=5 // pred_fallthru
      _
    %p155 = scmp.le.s32.totalorder 1, %s9
    %p156 = scmp.lt.s32.totalorder %s9, 5
    %p157 = pnand %p155, %p156
    %p158 = pneg %p157
    // Predicated region
    $region29: #{cnn_forward.3} parent=5 // pred_check
      _
    $region30: #{cnn_forward.3} parent=5 // pred_check_branch
      %160 = sbr.rel (%p157) target = $region32
    $region31: #{cnn_forward.3} parent=5 // pred_region
      %s161 = ssub.s32 %s9, 1
      %s162 = smul.u32 49, %s18
      %p163 = scmp.lt.s32.totalorder %s19, 3
      %s164 = scalar_select %p163, %s19, 3
      %p165 = scmp.lt.s32.totalorder %s162, 48
      %s166 = scalar_select %p165, %s162, 48
      %s167 = smul.addr %s164, 49
      %s168 = sadd.s32 %s166, %s167
      %s169 = smul.addr %s168, 8
      %s170 = scalar_lea.vmem %s0, %s169
      %p171 = pneg %p49
      %p172 = pneg %p46
      %p173 = pneg %p70
      %p174 = pneg %p67
      %p175 = pneg %p91
      %p176 = pneg %p88
      %p177 = pneg %p117
      %p178 = pneg %p114
      %s179 = smul.u32 49, %s18
      %p180 = scmp.lt.s32.totalorder %s179, 48
      %s181 = scalar_select %p180, %s179, 48
      %s182 = smul.addr %s181, 8
      %s183 = scalar_lea.vmem %s3, %s182
      %s184 = smul.u32 49, %s18
      %p185 = scmp.lt.s32.totalorder %s19, 3
      %s186 = scalar_select %p185, %s19, 3
      %p187 = scmp.lt.s32.totalorder %s184, 48
      %s188 = scalar_select %p187, %s184, 48
      %s189 = smul.addr %s186, 49
      %s190 = sadd.s32 %s188, %s189
      %s191 = smul.addr %s190, 8
      %s192 = scalar_lea.vmem %s0, %s191
      %s193 = smul.u32 49, %s18
      %s194 = smul.u32 49, %s18
      %p195 = scmp.lt.s32.totalorder %s194, 48
      %s196 = scalar_select %p195, %s194, 48
      %s197 = smul.addr %s196, 8
      %s198 = scalar_lea.vmem %s3, %s197
      %s199 = smul.u32 49, %s18
      %v200 = vld [vmem:[%s192] sm:$0xff]
      %v201 = vld [vmem:[%s192 + $0x8] sm:$0xff]
      %v202 = vld [vmem:[%s192 + $0x10] sm:$0xff]
      %v203 = vld [vmem:[%s192 + $0x18] sm:$0xff]
      %v204 = vld [vmem:[%s192 + $0x20] sm:$0xff]
      %v205 = vld [vmem:[%s192 + $0x28] sm:$0xff]
      %v206 = vld [vmem:[%s192 + $0x30] sm:$0xff]
      %v207 = vld [vmem:[%s192 + $0x38] sm:$0xff]
      %v208 = vld [vmem:[%s192 + $0x40] sm:$0xff]
      %v209 = vld [vmem:[%s192 + $0x48] sm:$0xff]
      %v210 = vld [vmem:[%s192 + $0x50] sm:$0xff]
      %v211 = vld [vmem:[%s192 + $0x58] sm:$0xff]
      %v212 = vld [vmem:[%s192 + $0x60] sm:$0xff]
      %v213 = vld [vmem:[%s192 + $0x68] sm:$0xff]
      %v214 = vld [vmem:[%s192 + $0x70] sm:$0xff]
      %v215 = vld [vmem:[%s192 + $0x78] sm:$0xff]
      %v216 = vld [vmem:[%s192 + $0x80] sm:$0xff]
      %v217 = vld [vmem:[%s192 + $0x88] sm:$0xff]
      %v218 = vld [vmem:[%s192 + $0x90] sm:$0xff]
      %v219 = vld [vmem:[%s192 + $0x98] sm:$0xff]
      %v220 = vld [vmem:[%s192 + $0xa0] sm:$0xff]
      %v221 = vld [vmem:[%s192 + $0xa8] sm:$0xff]
      %v222 = vld [vmem:[%s192 + $0xb0] sm:$0xff]
      %v223 = vld [vmem:[%s192 + $0xb8] sm:$0xff]
      %v224 = vld [vmem:[%s192 + $0xc0] sm:$0xff]
      %v225 = vld [vmem:[%s192 + $0xc8] sm:$0xff]
      %v226 = vld [vmem:[%s192 + $0xd0] sm:$0xff]
      %v227 = vld [vmem:[%s192 + $0xd8] sm:$0xff]
      %v228 = vld [vmem:[%s192 + $0xe0] sm:$0xff]
      %v229 = vld [vmem:[%s192 + $0xe8] sm:$0xff]
      %v230 = vld [vmem:[%s192 + $0xf0] sm:$0xff]
      %v231 = vld [vmem:[%s192 + $0xf8] sm:$0xff]
      %v232 = vld [vmem:[%s192 + $0x100] sm:$0xff]
      %v233 = vld [vmem:[%s192 + $0x108] sm:$0xff]
      %v234 = vld [vmem:[%s192 + $0x110] sm:$0xff]
      %v235 = vld [vmem:[%s192 + $0x118] sm:$0xff]
      %v236 = vld [vmem:[%s192 + $0x120] sm:$0xff]
      %v237 = vld [vmem:[%s192 + $0x128] sm:$0xff]
      %v238 = vld [vmem:[%s192 + $0x130] sm:$0xff]
      %v239 = vld [vmem:[%s192 + $0x138] sm:$0xff]
      %v240 = vld [vmem:[%s192 + $0x140] sm:$0xff]
      %v241 = vld [vmem:[%s192 + $0x148] sm:$0xff]
      %v242 = vld [vmem:[%s192 + $0x150] sm:$0xff]
      %v243 = vld [vmem:[%s192 + $0x158] sm:$0xff]
      %v244 = vld [vmem:[%s192 + $0x160] sm:$0xff]
      %v245 = vld [vmem:[%s192 + $0x168] sm:$0xff]
      %v246 = vld [vmem:[%s192 + $0x170] sm:$0xff]
      %v247 = vld [vmem:[%s192 + $0x178] sm:$0xff]
      %v248 = vld [vmem:[%s192 + $0x180] sm:$0xff]
      %v249 = vld [vmem:[%s1] sm:$0xff]
      %v250 = vld [vmem:[%s1 + $0x8] sm:$0xff]
      %v251 = vld [vmem:[%s1 + $0x10] sm:$0xff]
      %v252 = vld [vmem:[%s1 + $0x18] sm:$0x1]
      %vm253 = vcmask 203776
      %v255 = vsel %vm253, %v200, 0
      %v258 = vsel %vm253, %v201, 0
      %v261 = vsel %vm253, %v202, 0
      %v264 = vsel %vm253, %v203, 0
      %v267 = vsel %vm253, %v204, 0
      %v270 = vsel %vm253, %v205, 0
      %v273 = vsel %vm253, %v206, 0
      %v276 = vsel %vm253, %v207, 0
      %v279 = vsel %vm253, %v208, 0
      %v282 = vsel %vm253, %v209, 0
      %v285 = vsel %vm253, %v210, 0
      %v288 = vsel %vm253, %v211, 0
      %v291 = vsel %vm253, %v212, 0
      %v294 = vsel %vm253, %v213, 0
      %v297 = vsel %vm253, %v214, 0
      %v300 = vsel %vm253, %v215, 0
      %v303 = vsel %vm253, %v216, 0
      %v306 = vsel %vm253, %v217, 0
      %v309 = vsel %vm253, %v218, 0
      %v312 = vsel %vm253, %v219, 0
      %v315 = vsel %vm253, %v220, 0
      %v318 = vsel %vm253, %v221, 0
      %v321 = vsel %vm253, %v222, 0
      %v324 = vsel %vm253, %v223, 0
      %v327 = vsel %vm253, %v224, 0
      %v330 = vsel %vm253, %v225, 0
      %v333 = vsel %vm253, %v226, 0
      %v336 = vsel %vm253, %v227, 0
      %v339 = vsel %vm253, %v228, 0
      %v342 = vsel %vm253, %v229, 0
      %v345 = vsel %vm253, %v230, 0
      %v348 = vsel %vm253, %v231, 0
      %v351 = vsel %vm253, %v232, 0
      %v354 = vsel %vm253, %v233, 0
      %v357 = vsel %vm253, %v234, 0
      %v360 = vsel %vm253, %v235, 0
      %v363 = vsel %vm253, %v236, 0
      %v366 = vsel %vm253, %v237, 0
      %v369 = vsel %vm253, %v238, 0
      %v372 = vsel %vm253, %v239, 0
      %v375 = vsel %vm253, %v240, 0
      %v378 = vsel %vm253, %v241, 0
      %v381 = vsel %vm253, %v242, 0
      %v384 = vsel %vm253, %v243, 0
      %v387 = vsel %vm253, %v244, 0
      %v390 = vsel %vm253, %v245, 0
      %v393 = vsel %vm253, %v246, 0
      %v396 = vsel %vm253, %v247, 0
      %v399 = vsel %vm253, %v248, 0
      %vm401 = vcmask 1040384
      %v403 = vsel %vm401, %v252, 0
      %405 = vmatprep.subr.mxu0 0.0
      %406 = vmatpush1.msra.mxu0 %v249
      %407 = vmatprep.subr.mxu0 0.0
      %408 = vmatpush1.msra.mxu0 %v250
      %409 = vmatprep.subr.mxu0 0.0
      %410 = vmatpush1.msra.mxu0 %v251
      %411 = vmatprep.subr.mxu0 0.0
      %412 = vmatpush1.msra.mxu0 %v403
      %413 = vmatprep.subr.mxu0 0.0
      %414 = vmatpush1.msra.mxu0 0.0
      %415 = vmatprep.subr.mxu0 0.0
      %416 = vmatpush1.msra.mxu0 0.0
      %417 = vmatprep.subr.mxu0 0.0
      %418 = vmatpush1.msra.mxu0 0.0
      %419 = vmatprep.subr.mxu0 0.0
      %420 = vmatpush1.msra.mxu0 0.0
      %421 = vmatprep.subr.mxu0 0.0
      %422 = vmatpush1.msra.mxu0 0.0
      %423 = vmatprep.subr.mxu0 0.0
      %424 = vmatpush1.msra.mxu0 0.0
      %425 = vmatprep.subr.mxu0 0.0
      %426 = vmatpush1.msra.mxu0 0.0
      %427 = vmatprep.subr.mxu0 0.0
      %428 = vmatpush1.msra.mxu0 0.0
      %429 = vmatprep.subr.mxu0 0.0
      %430 = vmatpush1.msra.mxu0 0.0
      %431 = vmatprep.subr.mxu0 0.0
      %432 = vmatpush1.msra.mxu0 0.0
      %433 = vmatprep.subr.mxu0 0.0
      %434 = vmatpush1.msra.mxu0 0.0
      %435 = vmatprep.subr.mxu0 0.0
      %436 = vmatpush1.msra.mxu0 0.0
      %437 = vmatprep.subr.mxu0 0.0
      %438 = vmatpush1.msra.mxu0 0.0
      %439 = vmatprep.subr.mxu0 0.0
      %440 = vmatpush1.msra.mxu0 0.0
      %441 = vmatprep.subr.mxu0 0.0
      %442 = vmatpush1.msra.mxu0 0.0
      %443 = vmatprep.subr.mxu0 0.0
      %444 = vmatpush1.msra.mxu0 0.0
      %445 = vmatprep.subr.mxu0 0.0
      %446 = vmatpush1.msra.mxu0 0.0
      %447 = vmatprep.subr.mxu0 0.0
      %448 = vmatpush1.msra.mxu0 0.0
      %449 = vmatprep.subr.mxu0 0.0
      %450 = vmatpush1.msra.mxu0 0.0
      %451 = vmatprep.subr.mxu0 0.0
      %452 = vmatpush1.msra.mxu0 0.0
      %453 = vmatprep.subr.mxu0 0.0
      %454 = vmatpush1.msra.mxu0 0.0
      %455 = vmatprep.subr.mxu0 0.0
      %456 = vmatpush1.msra.mxu0 0.0
      %457 = vmatprep.subr.mxu0 0.0
      %458 = vmatpush1.msra.mxu0 0.0
      %459 = vmatprep.subr.mxu0 0.0
      %460 = vmatpush1.msra.mxu0 0.0
      %461 = vmatprep.subr.mxu0 0.0
      %462 = vmatpush1.msra.mxu0 0.0
      %463 = vmatprep.subr.mxu0 0.0
      %464 = vmatpush1.msra.mxu0 0.0
      %465 = vmatprep.subr.mxu0 0.0
      %466 = vmatpush1.msra.mxu0 0.0
      %467 = vmatprep.subr.mxu0 0.0
      %468 = vmatpush1.msra.mxu0 0.0
      %469 = vmatprep.mubr.f32.mxu0 0.0
      %470 = vmatmul.mubr.f32.gmra.mrb[0].mxu0 %v255
      %v471 = vpop.f32.mrb[0].mxu0
      %v472 = vadd.f32 0.0, %v471
      %v473 = vpop.f32.mrb[0].mxu0
      %474 = vmatprep.mubr.f32.mxu0 0.0
      %475 = vmatmul.mubr.f32.gmra.mrb[0].mxu0 %v258
      %v476 = vpop.f32.mrb[0].mxu0
      %v477 = vadd.f32 0.0, %v476
      %v478 = vpop.f32.mrb[0].mxu0
      %479 = vmatprep.mubr.f32.mxu0 0.0
      %480 = vmatmul.mubr.f32.gmra.mrb[0].mxu0 %v261
      %v481 = vpop.f32.mrb[0].mxu0
      %v482 = vadd.f32 0.0, %v481
      %v483 = vpop.f32.mrb[0].mxu0
      %484 = vmatprep.mubr.f32.mxu0 0.0
      %485 = vmatmul.mubr.f32.gmra.mrb[0].mxu0 %v264
      %v486 = vpop.f32.mrb[0].mxu0
      %v487 = vadd.f32 0.0, %v486
      %v488 = vpop.f32.mrb[0].mxu0
      %489 = vmatprep.mubr.f32.mxu0 0.0
      %490 = vmatmul.mubr.f32.gmra.mrb[0].mxu0 %v267
      %v491 = vpop.f32.mrb[0].mxu0
      %v492 = vadd.f32 0.0, %v491
      %v493 = vpop.f32.mrb[0].mxu0
      %494 = vmatprep.mubr.f32.mxu0 0.0
      %495 = vmatmul.mubr.f32.gmra.mrb[0].mxu0 %v270
      %v496 = vpop.f32.mrb[0].mxu0
      %v497 = vadd.f32 0.0, %v496
      %v498 = vpop.f32.mrb[0].mxu0
      %499 = vmatprep.mubr.f32.mxu0 0.0
      %500 = vmatmul.mubr.f32.gmra.mrb[0].mxu0 %v273
      %v501 = vpop.f32.mrb[0].mxu0
      %v502 = vadd.f32 0.0, %v501
      %v503 = vpop.f32.mrb[0].mxu0
      %504 = vmatprep.mubr.f32.mxu0 0.0
      %505 = vmatmul.mubr.f32.gmra.mrb[0].mxu0 %v276
      %v506 = vpop.f32.mrb[0].mxu0
      %v507 = vadd.f32 0.0, %v506
      %v508 = vpop.f32.mrb[0].mxu0
      %509 = vmatprep.mubr.f32.mxu0 0.0
      %510 = vmatmul.mubr.f32.gmra.mrb[0].mxu0 %v279
      %v511 = vpop.f32.mrb[0].mxu0
      %v512 = vadd.f32 0.0, %v511
      %v513 = vpop.f32.mrb[0].mxu0
      %514 = vmatprep.mubr.f32.mxu0 0.0
      %515 = vmatmul.mubr.f32.gmra.mrb[0].mxu0 %v282
      %v516 = vpop.f32.mrb[0].mxu0
      %v517 = vadd.f32 0.0, %v516
      %v518 = vpop.f32.mrb[0].mxu0
      %519 = vmatprep.mubr.f32.mxu0 0.0
      %520 = vmatmul.mubr.f32.gmra.mrb[0].mxu0 %v285
      %v521 = vpop.f32.mrb[0].mxu0
      %v522 = vadd.f32 0.0, %v521
      %v523 = vpop.f32.mrb[0].mxu0
      %524 = vmatprep.mubr.f32.mxu0 0.0
      %525 = vmatmul.mubr.f32.gmra.mrb[0].mxu0 %v288
      %v526 = vpop.f32.mrb[0].mxu0
      %v527 = vadd.f32 0.0, %v526
      %v528 = vpop.f32.mrb[0].mxu0
      %529 = vmatprep.mubr.f32.mxu0 0.0
      %530 = vmatmul.mubr.f32.gmra.mrb[0].mxu0 %v291
      %v531 = vpop.f32.mrb[0].mxu0
      %v532 = vadd.f32 0.0, %v531
      %v533 = vpop.f32.mrb[0].mxu0
      %534 = vmatprep.mubr.f32.mxu0 0.0
      %535 = vmatmul.mubr.f32.gmra.mrb[0].mxu0 %v294
      %v536 = vpop.f32.mrb[0].mxu0
      %v537 = vadd.f32 0.0, %v536
      %v538 = vpop.f32.mrb[0].mxu0
      %539 = vmatprep.mubr.f32.mxu0 0.0
      %540 = vmatmul.mubr.f32.gmra.mrb[0].mxu0 %v297
      %v541 = vpop.f32.mrb[0].mxu0
      %v542 = vadd.f32 0.0, %v541
      %v543 = vpop.f32.mrb[0].mxu0
      %544 = vmatprep.mubr.f32.mxu0 0.0
      %545 = vmatmul.mubr.f32.gmra.mrb[0].mxu0 %v300
      %v546 = vpop.f32.mrb[0].mxu0
      %v547 = vadd.f32 0.0, %v546
      %v548 = vpop.f32.mrb[0].mxu0
      %549 = vmatprep.mubr.f32.mxu0 0.0
      %550 = vmatmul.mubr.f32.gmra.mrb[0].mxu0 %v303
      %v551 = vpop.f32.mrb[0].mxu0
      %v552 = vadd.f32 0.0, %v551
      %v553 = vpop.f32.mrb[0].mxu0
      %554 = vmatprep.mubr.f32.mxu0 0.0
      %555 = vmatmul.mubr.f32.gmra.mrb[0].mxu0 %v306
      %v556 = vpop.f32.mrb[0].mxu0
      %v557 = vadd.f32 0.0, %v556
      %v558 = vpop.f32.mrb[0].mxu0
      %559 = vmatprep.mubr.f32.mxu0 0.0
      %560 = vmatmul.mubr.f32.gmra.mrb[0].mxu0 %v309
      %v561 = vpop.f32.mrb[0].mxu0
      %v562 = vadd.f32 0.0, %v561
      %v563 = vpop.f32.mrb[0].mxu0
      %564 = vmatprep.mubr.f32.mxu0 0.0
      %565 = vmatmul.mubr.f32.gmra.mrb[0].mxu0 %v312
      %v566 = vpop.f32.mrb[0].mxu0
      %v567 = vadd.f32 0.0, %v566
      %v568 = vpop.f32.mrb[0].mxu0
      %569 = vmatprep.mubr.f32.mxu0 0.0
      %570 = vmatmul.mubr.f32.gmra.mrb[0].mxu0 %v315
      %v571 = vpop.f32.mrb[0].mxu0
      %v572 = vadd.f32 0.0, %v571
      %v573 = vpop.f32.mrb[0].mxu0
      %574 = vmatprep.mubr.f32.mxu0 0.0
      %575 = vmatmul.mubr.f32.gmra.mrb[0].mxu0 %v318
      %v576 = vpop.f32.mrb[0].mxu0
      %v577 = vadd.f32 0.0, %v576
      %v578 = vpop.f32.mrb[0].mxu0
      %579 = vmatprep.mubr.f32.mxu0 0.0
      %580 = vmatmul.mubr.f32.gmra.mrb[0].mxu0 %v321
      %v581 = vpop.f32.mrb[0].mxu0
      %v582 = vadd.f32 0.0, %v581
      %v583 = vpop.f32.mrb[0].mxu0
      %584 = vmatprep.mubr.f32.mxu0 0.0
      %585 = vmatmul.mubr.f32.gmra.mrb[0].mxu0 %v324
      %v586 = vpop.f32.mrb[0].mxu0
      %v587 = vadd.f32 0.0, %v586
      %v588 = vpop.f32.mrb[0].mxu0
      %589 = vmatprep.mubr.f32.mxu0 0.0
      %590 = vmatmul.mubr.f32.gmra.mrb[0].mxu0 %v327
      %v591 = vpop.f32.mrb[0].mxu0
      %v592 = vadd.f32 0.0, %v591
      %v593 = vpop.f32.mrb[0].mxu0
      %594 = vmatprep.mubr.f32.mxu0 0.0
      %595 = vmatmul.mubr.f32.gmra.mrb[0].mxu0 %v330
      %v596 = vpop.f32.mrb[0].mxu0
      %v597 = vadd.f32 0.0, %v596
      %v598 = vpop.f32.mrb[0].mxu0
      %599 = vmatprep.mubr.f32.mxu0 0.0
      %600 = vmatmul.mubr.f32.gmra.mrb[0].mxu0 %v333
      %v601 = vpop.f32.mrb[0].mxu0
      %v602 = vadd.f32 0.0, %v601
      %v603 = vpop.f32.mrb[0].mxu0
      %604 = vmatprep.mubr.f32.mxu0 0.0
      %605 = vmatmul.mubr.f32.gmra.mrb[0].mxu0 %v336
      %v606 = vpop.f32.mrb[0].mxu0
      %v607 = vadd.f32 0.0, %v606
      %v608 = vpop.f32.mrb[0].mxu0
      %609 = vmatprep.mubr.f32.mxu0 0.0
      %610 = vmatmul.mubr.f32.gmra.mrb[0].mxu0 %v339
      %v611 = vpop.f32.mrb[0].mxu0
      %v612 = vadd.f32 0.0, %v611
      %v613 = vpop.f32.mrb[0].mxu0
      %614 = vmatprep.mubr.f32.mxu0 0.0
      %615 = vmatmul.mubr.f32.gmra.mrb[0].mxu0 %v342
      %v616 = vpop.f32.mrb[0].mxu0
      %v617 = vadd.f32 0.0, %v616
      %v618 = vpop.f32.mrb[0].mxu0
      %619 = vmatprep.mubr.f32.mxu0 0.0
      %620 = vmatmul.mubr.f32.gmra.mrb[0].mxu0 %v345
      %v621 = vpop.f32.mrb[0].mxu0
      %v622 = vadd.f32 0.0, %v621
      %v623 = vpop.f32.mrb[0].mxu0
      %624 = vmatprep.mubr.f32.mxu0 0.0
      %625 = vmatmul.mubr.f32.gmra.mrb[0].mxu0 %v348
      %v626 = vpop.f32.mrb[0].mxu0
      %v627 = vadd.f32 0.0, %v626
      %v628 = vpop.f32.mrb[0].mxu0
      %629 = vmatprep.mubr.f32.mxu0 0.0
      %630 = vmatmul.mubr.f32.gmra.mrb[0].mxu0 %v351
      %v631 = vpop.f32.mrb[0].mxu0
      %v632 = vadd.f32 0.0, %v631
      %v633 = vpop.f32.mrb[0].mxu0
      %634 = vmatprep.mubr.f32.mxu0 0.0
      %635 = vmatmul.mubr.f32.gmra.mrb[0].mxu0 %v354
      %v636 = vpop.f32.mrb[0].mxu0
      %v637 = vadd.f32 0.0, %v636
      %v638 = vpop.f32.mrb[0].mxu0
      %639 = vmatprep.mubr.f32.mxu0 0.0
      %640 = vmatmul.mubr.f32.gmra.mrb[0].mxu0 %v357
      %v641 = vpop.f32.mrb[0].mxu0
      %v642 = vadd.f32 0.0, %v641
      %v643 = vpop.f32.mrb[0].mxu0
      %644 = vmatprep.mubr.f32.mxu0 0.0
      %645 = vmatmul.mubr.f32.gmra.mrb[0].mxu0 %v360
      %v646 = vpop.f32.mrb[0].mxu0
      %v647 = vadd.f32 0.0, %v646
      %v648 = vpop.f32.mrb[0].mxu0
      %649 = vmatprep.mubr.f32.mxu0 0.0
      %650 = vmatmul.mubr.f32.gmra.mrb[0].mxu0 %v363
      %v651 = vpop.f32.mrb[0].mxu0
      %v652 = vadd.f32 0.0, %v651
      %v653 = vpop.f32.mrb[0].mxu0
      %654 = vmatprep.mubr.f32.mxu0 0.0
      %655 = vmatmul.mubr.f32.gmra.mrb[0].mxu0 %v366
      %v656 = vpop.f32.mrb[0].mxu0
      %v657 = vadd.f32 0.0, %v656
      %v658 = vpop.f32.mrb[0].mxu0
      %659 = vmatprep.mubr.f32.mxu0 0.0
      %660 = vmatmul.mubr.f32.gmra.mrb[0].mxu0 %v369
      %v661 = vpop.f32.mrb[0].mxu0
      %v662 = vadd.f32 0.0, %v661
      %v663 = vpop.f32.mrb[0].mxu0
      %664 = vmatprep.mubr.f32.mxu0 0.0
      %665 = vmatmul.mubr.f32.gmra.mrb[0].mxu0 %v372
      %v666 = vpop.f32.mrb[0].mxu0
      %v667 = vadd.f32 0.0, %v666
      %v668 = vpop.f32.mrb[0].mxu0
      %669 = vmatprep.mubr.f32.mxu0 0.0
      %670 = vmatmul.mubr.f32.gmra.mrb[0].mxu0 %v375
      %v671 = vpop.f32.mrb[0].mxu0
      %v672 = vadd.f32 0.0, %v671
      %v673 = vpop.f32.mrb[0].mxu0
      %674 = vmatprep.mubr.f32.mxu0 0.0
      %675 = vmatmul.mubr.f32.gmra.mrb[0].mxu0 %v378
      %v676 = vpop.f32.mrb[0].mxu0
      %v677 = vadd.f32 0.0, %v676
      %v678 = vpop.f32.mrb[0].mxu0
      %679 = vmatprep.mubr.f32.mxu0 0.0
      %680 = vmatmul.mubr.f32.gmra.mrb[0].mxu0 %v381
      %v681 = vpop.f32.mrb[0].mxu0
      %v682 = vadd.f32 0.0, %v681
      %v683 = vpop.f32.mrb[0].mxu0
      %684 = vmatprep.mubr.f32.mxu0 0.0
      %685 = vmatmul.mubr.f32.gmra.mrb[0].mxu0 %v384
      %v686 = vpop.f32.mrb[0].mxu0
      %v687 = vadd.f32 0.0, %v686
      %v688 = vpop.f32.mrb[0].mxu0
      %689 = vmatprep.mubr.f32.mxu0 0.0
      %690 = vmatmul.mubr.f32.gmra.mrb[0].mxu0 %v387
      %v691 = vpop.f32.mrb[0].mxu0
      %v692 = vadd.f32 0.0, %v691
      %v693 = vpop.f32.mrb[0].mxu0
      %694 = vmatprep.mubr.f32.mxu0 0.0
      %695 = vmatmul.mubr.f32.gmra.mrb[0].mxu0 %v390
      %v696 = vpop.f32.mrb[0].mxu0
      %v697 = vadd.f32 0.0, %v696
      %v698 = vpop.f32.mrb[0].mxu0
      %699 = vmatprep.mubr.f32.mxu0 0.0
      %700 = vmatmul.mubr.f32.gmra.mrb[0].mxu0 %v393
      %v701 = vpop.f32.mrb[0].mxu0
      %v702 = vadd.f32 0.0, %v701
      %v703 = vpop.f32.mrb[0].mxu0
      %704 = vmatprep.mubr.f32.mxu0 0.0
      %705 = vmatmul.mubr.f32.gmra.mrb[0].mxu0 %v396
      %v706 = vpop.f32.mrb[0].mxu0
      %v707 = vadd.f32 0.0, %v706
      %v708 = vpop.f32.mrb[0].mxu0
      %709 = vmatprep.mubr.f32.mxu0 0.0
      %710 = vmatmul.mubr.f32.gmra.mrb[0].mxu0 %v399
      %v711 = vpop.f32.mrb[0].mxu0
      %v712 = vadd.f32 0.0, %v711
      %v713 = vpop.f32.mrb[0].mxu0
      %714 = vdwg.mxu0
      %p715 = scmp.eq.s32.totalorder %s19, 0
      // Predicated region
      $region33: #{cnn_forward.3} parent=31 // pred_check
        %p716 = pneg %p715
      $region34: #{cnn_forward.3} parent=31 // pred_check_branch
        %718 = sbr.rel (%p716) target = $region36
      $region35: #{cnn_forward.3} parent=31 // pred_region
        %vm719 = vcmask 130048
        %720 = vst.msk [vmem:[%s198] sm:$0xff] %vm719, %v472
        %721 = vst.msk [vmem:[%s198 + $0x8] sm:$0xff] %vm719, %v477
        %722 = vst.msk [vmem:[%s198 + $0x10] sm:$0xff] %vm719, %v482
        %723 = vst.msk [vmem:[%s198 + $0x18] sm:$0xff] %vm719, %v487
        %724 = vst.msk [vmem:[%s198 + $0x20] sm:$0xff] %vm719, %v492
        %725 = vst.msk [vmem:[%s198 + $0x28] sm:$0xff] %vm719, %v497
        %726 = vst.msk [vmem:[%s198 + $0x30] sm:$0xff] %vm719, %v502
        %727 = vst.msk [vmem:[%s198 + $0x38] sm:$0xff] %vm719, %v507
        %728 = vst.msk [vmem:[%s198 + $0x40] sm:$0xff] %vm719, %v512
        %729 = vst.msk [vmem:[%s198 + $0x48] sm:$0xff] %vm719, %v517
        %730 = vst.msk [vmem:[%s198 + $0x50] sm:$0xff] %vm719, %v522
        %731 = vst.msk [vmem:[%s198 + $0x58] sm:$0xff] %vm719, %v527
        %732 = vst.msk [vmem:[%s198 + $0x60] sm:$0xff] %vm719, %v532
        %733 = vst.msk [vmem:[%s198 + $0x68] sm:$0xff] %vm719, %v537
        %734 = vst.msk [vmem:[%s198 + $0x70] sm:$0xff] %vm719, %v542
        %735 = vst.msk [vmem:[%s198 + $0x78] sm:$0xff] %vm719, %v547
        %736 = vst.msk [vmem:[%s198 + $0x80] sm:$0xff] %vm719, %v552
        %737 = vst.msk [vmem:[%s198 + $0x88] sm:$0xff] %vm719, %v557
        %738 = vst.msk [vmem:[%s198 + $0x90] sm:$0xff] %vm719, %v562
        %739 = vst.msk [vmem:[%s198 + $0x98] sm:$0xff] %vm719, %v567
        %740 = vst.msk [vmem:[%s198 + $0xa0] sm:$0xff] %vm719, %v572
        %741 = vst.msk [vmem:[%s198 + $0xa8] sm:$0xff] %vm719, %v577
        %742 = vst.msk [vmem:[%s198 + $0xb0] sm:$0xff] %vm719, %v582
        %743 = vst.msk [vmem:[%s198 + $0xb8] sm:$0xff] %vm719, %v587
        %744 = vst.msk [vmem:[%s198 + $0xc0] sm:$0xff] %vm719, %v592
        %745 = vst.msk [vmem:[%s198 + $0xc8] sm:$0xff] %vm719, %v597
        %746 = vst.msk [vmem:[%s198 + $0xd0] sm:$0xff] %vm719, %v602
        %747 = vst.msk [vmem:[%s198 + $0xd8] sm:$0xff] %vm719, %v607
        %748 = vst.msk [vmem:[%s198 + $0xe0] sm:$0xff] %vm719, %v612
        %749 = vst.msk [vmem:[%s198 + $0xe8] sm:$0xff] %vm719, %v617
        %750 = vst.msk [vmem:[%s198 + $0xf0] sm:$0xff] %vm719, %v622
        %751 = vst.msk [vmem:[%s198 + $0xf8] sm:$0xff] %vm719, %v627
        %752 = vst.msk [vmem:[%s198 + $0x100] sm:$0xff] %vm719, %v632
        %753 = vst.msk [vmem:[%s198 + $0x108] sm:$0xff] %vm719, %v637
        %754 = vst.msk [vmem:[%s198 + $0x110] sm:$0xff] %vm719, %v642
        %755 = vst.msk [vmem:[%s198 + $0x118] sm:$0xff] %vm719, %v647
        %756 = vst.msk [vmem:[%s198 + $0x120] sm:$0xff] %vm719, %v652
        %757 = vst.msk [vmem:[%s198 + $0x128] sm:$0xff] %vm719, %v657
        %758 = vst.msk [vmem:[%s198 + $0x130] sm:$0xff] %vm719, %v662
        %759 = vst.msk [vmem:[%s198 + $0x138] sm:$0xff] %vm719, %v667
        %760 = vst.msk [vmem:[%s198 + $0x140] sm:$0xff] %vm719, %v672
        %761 = vst.msk [vmem:[%s198 + $0x148] sm:$0xff] %vm719, %v677
        %762 = vst.msk [vmem:[%s198 + $0x150] sm:$0xff] %vm719, %v682
        %763 = vst.msk [vmem:[%s198 + $0x158] sm:$0xff] %vm719, %v687
        %764 = vst.msk [vmem:[%s198 + $0x160] sm:$0xff] %vm719, %v692
        %765 = vst.msk [vmem:[%s198 + $0x168] sm:$0xff] %vm719, %v697
        %766 = vst.msk [vmem:[%s198 + $0x170] sm:$0xff] %vm719, %v702
        %767 = vst.msk [vmem:[%s198 + $0x178] sm:$0xff] %vm719, %v707
        %768 = vst.msk [vmem:[%s198 + $0x180] sm:$0xff] %vm719, %v712
      $region36: #{cnn_forward.3} parent=31 // pred_fallthru
        _
      %p769 = scmp.gt.s32.totalorder %s19, 0
      // Predicated region
      $region37: #{cnn_forward.3} parent=31 // pred_check
        %p770 = pneg %p769
      $region38: #{cnn_forward.3} parent=31 // pred_check_branch
        %772 = sbr.rel (%p770) target = $region40
      $region39: #{cnn_forward.3} parent=31 // pred_region
        %v773 = vld [vmem:[%s198] sm:$0xff]
        %v774 = vld [vmem:[%s198 + $0x8] sm:$0xff]
        %v775 = vld [vmem:[%s198 + $0x10] sm:$0xff]
        %v776 = vld [vmem:[%s198 + $0x18] sm:$0xff]
        %v777 = vld [vmem:[%s198 + $0x20] sm:$0xff]
        %v778 = vld [vmem:[%s198 + $0x28] sm:$0xff]
        %v779 = vld [vmem:[%s198 + $0x30] sm:$0xff]
        %v780 = vld [vmem:[%s198 + $0x38] sm:$0xff]
        %v781 = vld [vmem:[%s198 + $0x40] sm:$0xff]
        %v782 = vld [vmem:[%s198 + $0x48] sm:$0xff]
        %v783 = vld [vmem:[%s198 + $0x50] sm:$0xff]
        %v784 = vld [vmem:[%s198 + $0x58] sm:$0xff]
        %v785 = vld [vmem:[%s198 + $0x60] sm:$0xff]
        %v786 = vld [vmem:[%s198 + $0x68] sm:$0xff]
        %v787 = vld [vmem:[%s198 + $0x70] sm:$0xff]
        %v788 = vld [vmem:[%s198 + $0x78] sm:$0xff]
        %v789 = vld [vmem:[%s198 + $0x80] sm:$0xff]
        %v790 = vld [vmem:[%s198 + $0x88] sm:$0xff]
        %v791 = vld [vmem:[%s198 + $0x90] sm:$0xff]
        %v792 = vld [vmem:[%s198 + $0x98] sm:$0xff]
        %v793 = vld [vmem:[%s198 + $0xa0] sm:$0xff]
        %v794 = vld [vmem:[%s198 + $0xa8] sm:$0xff]
        %v795 = vld [vmem:[%s198 + $0xb0] sm:$0xff]
        %v796 = vld [vmem:[%s198 + $0xb8] sm:$0xff]
        %v797 = vld [vmem:[%s198 + $0xc0] sm:$0xff]
        %v798 = vld [vmem:[%s198 + $0xc8] sm:$0xff]
        %v799 = vld [vmem:[%s198 + $0xd0] sm:$0xff]
        %v800 = vld [vmem:[%s198 + $0xd8] sm:$0xff]
        %v801 = vld [vmem:[%s198 + $0xe0] sm:$0xff]
        %v802 = vld [vmem:[%s198 + $0xe8] sm:$0xff]
        %v803 = vld [vmem:[%s198 + $0xf0] sm:$0xff]
        %v804 = vld [vmem:[%s198 + $0xf8] sm:$0xff]
        %v805 = vld [vmem:[%s198 + $0x100] sm:$0xff]
        %v806 = vld [vmem:[%s198 + $0x108] sm:$0xff]
        %v807 = vld [vmem:[%s198 + $0x110] sm:$0xff]
        %v808 = vld [vmem:[%s198 + $0x118] sm:$0xff]
        %v809 = vld [vmem:[%s198 + $0x120] sm:$0xff]
        %v810 = vld [vmem:[%s198 + $0x128] sm:$0xff]
        %v811 = vld [vmem:[%s198 + $0x130] sm:$0xff]
        %v812 = vld [vmem:[%s198 + $0x138] sm:$0xff]
        %v813 = vld [vmem:[%s198 + $0x140] sm:$0xff]
        %v814 = vld [vmem:[%s198 + $0x148] sm:$0xff]
        %v815 = vld [vmem:[%s198 + $0x150] sm:$0xff]
        %v816 = vld [vmem:[%s198 + $0x158] sm:$0xff]
        %v817 = vld [vmem:[%s198 + $0x160] sm:$0xff]
        %v818 = vld [vmem:[%s198 + $0x168] sm:$0xff]
        %v819 = vld [vmem:[%s198 + $0x170] sm:$0xff]
        %v820 = vld [vmem:[%s198 + $0x178] sm:$0xff]
        %v821 = vld [vmem:[%s198 + $0x180] sm:$0xff]
        %v822 = vmax.f32 %v773, %v472
        %v823 = vmax.f32 %v774, %v477
        %v824 = vmax.f32 %v775, %v482
        %v825 = vmax.f32 %v776, %v487
        %v826 = vmax.f32 %v777, %v492
        %v827 = vmax.f32 %v778, %v497
        %v828 = vmax.f32 %v779, %v502
        %v829 = vmax.f32 %v780, %v507
        %v830 = vmax.f32 %v781, %v512
        %v831 = vmax.f32 %v782, %v517
        %v832 = vmax.f32 %v783, %v522
        %v833 = vmax.f32 %v784, %v527
        %v834 = vmax.f32 %v785, %v532
        %v835 = vmax.f32 %v786, %v537
        %v836 = vmax.f32 %v787, %v542
        %v837 = vmax.f32 %v788, %v547
        %v838 = vmax.f32 %v789, %v552
        %v839 = vmax.f32 %v790, %v557
        %v840 = vmax.f32 %v791, %v562
        %v841 = vmax.f32 %v792, %v567
        %v842 = vmax.f32 %v793, %v572
        %v843 = vmax.f32 %v794, %v577
        %v844 = vmax.f32 %v795, %v582
        %v845 = vmax.f32 %v796, %v587
        %v846 = vmax.f32 %v797, %v592
        %v847 = vmax.f32 %v798, %v597
        %v848 = vmax.f32 %v799, %v602
        %v849 = vmax.f32 %v800, %v607
        %v850 = vmax.f32 %v801, %v612
        %v851 = vmax.f32 %v802, %v617
        %v852 = vmax.f32 %v803, %v622
        %v853 = vmax.f32 %v804, %v627
        %v854 = vmax.f32 %v805, %v632
        %v855 = vmax.f32 %v806, %v637
        %v856 = vmax.f32 %v807, %v642
        %v857 = vmax.f32 %v808, %v647
        %v858 = vmax.f32 %v809, %v652
        %v859 = vmax.f32 %v810, %v657
        %v860 = vmax.f32 %v811, %v662
        %v861 = vmax.f32 %v812, %v667
        %v862 = vmax.f32 %v813, %v672
        %v863 = vmax.f32 %v814, %v677
        %v864 = vmax.f32 %v815, %v682
        %v865 = vmax.f32 %v816, %v687
        %v866 = vmax.f32 %v817, %v692
        %v867 = vmax.f32 %v818, %v697
        %v868 = vmax.f32 %v819, %v702
        %v869 = vmax.f32 %v820, %v707
        %v870 = vmax.f32 %v821, %v712
        %vm871 = vcmask 130048
        %872 = vst.msk [vmem:[%s198] sm:$0xff] %vm871, %v822
        %873 = vst.msk [vmem:[%s198 + $0x8] sm:$0xff] %vm871, %v823
        %874 = vst.msk [vmem:[%s198 + $0x10] sm:$0xff] %vm871, %v824
        %875 = vst.msk [vmem:[%s198 + $0x18] sm:$0xff] %vm871, %v825
        %876 = vst.msk [vmem:[%s198 + $0x20] sm:$0xff] %vm871, %v826
        %877 = vst.msk [vmem:[%s198 + $0x28] sm:$0xff] %vm871, %v827
        %878 = vst.msk [vmem:[%s198 + $0x30] sm:$0xff] %vm871, %v828
        %879 = vst.msk [vmem:[%s198 + $0x38] sm:$0xff] %vm871, %v829
        %880 = vst.msk [vmem:[%s198 + $0x40] sm:$0xff] %vm871, %v830
        %881 = vst.msk [vmem:[%s198 + $0x48] sm:$0xff] %vm871, %v831
        %882 = vst.msk [vmem:[%s198 + $0x50] sm:$0xff] %vm871, %v832
        %883 = vst.msk [vmem:[%s198 + $0x58] sm:$0xff] %vm871, %v833
        %884 = vst.msk [vmem:[%s198 + $0x60] sm:$0xff] %vm871, %v834
        %885 = vst.msk [vmem:[%s198 + $0x68] sm:$0xff] %vm871, %v835
        %886 = vst.msk [vmem:[%s198 + $0x70] sm:$0xff] %vm871, %v836
        %887 = vst.msk [vmem:[%s198 + $0x78] sm:$0xff] %vm871, %v837
        %888 = vst.msk [vmem:[%s198 + $0x80] sm:$0xff] %vm871, %v838
        %889 = vst.msk [vmem:[%s198 + $0x88] sm:$0xff] %vm871, %v839
        %890 = vst.msk [vmem:[%s198 + $0x90] sm:$0xff] %vm871, %v840
        %891 = vst.msk [vmem:[%s198 + $0x98] sm:$0xff] %vm871, %v841
        %892 = vst.msk [vmem:[%s198 + $0xa0] sm:$0xff] %vm871, %v842
        %893 = vst.msk [vmem:[%s198 + $0xa8] sm:$0xff] %vm871, %v843
        %894 = vst.msk [vmem:[%s198 + $0xb0] sm:$0xff] %vm871, %v844
        %895 = vst.msk [vmem:[%s198 + $0xb8] sm:$0xff] %vm871, %v845
        %896 = vst.msk [vmem:[%s198 + $0xc0] sm:$0xff] %vm871, %v846
        %897 = vst.msk [vmem:[%s198 + $0xc8] sm:$0xff] %vm871, %v847
        %898 = vst.msk [vmem:[%s198 + $0xd0] sm:$0xff] %vm871, %v848
        %899 = vst.msk [vmem:[%s198 + $0xd8] sm:$0xff] %vm871, %v849
        %900 = vst.msk [vmem:[%s198 + $0xe0] sm:$0xff] %vm871, %v850
        %901 = vst.msk [vmem:[%s198 + $0xe8] sm:$0xff] %vm871, %v851
        %902 = vst.msk [vmem:[%s198 + $0xf0] sm:$0xff] %vm871, %v852
        %903 = vst.msk [vmem:[%s198 + $0xf8] sm:$0xff] %vm871, %v853
        %904 = vst.msk [vmem:[%s198 + $0x100] sm:$0xff] %vm871, %v854
        %905 = vst.msk [vmem:[%s198 + $0x108] sm:$0xff] %vm871, %v855
        %906 = vst.msk [vmem:[%s198 + $0x110] sm:$0xff] %vm871, %v856
        %907 = vst.msk [vmem:[%s198 + $0x118] sm:$0xff] %vm871, %v857
        %908 = vst.msk [vmem:[%s198 + $0x120] sm:$0xff] %vm871, %v858
        %909 = vst.msk [vmem:[%s198 + $0x128] sm:$0xff] %vm871, %v859
        %910 = vst.msk [vmem:[%s198 + $0x130] sm:$0xff] %vm871, %v860
        %911 = vst.msk [vmem:[%s198 + $0x138] sm:$0xff] %vm871, %v861
        %912 = vst.msk [vmem:[%s198 + $0x140] sm:$0xff] %vm871, %v862
        %913 = vst.msk [vmem:[%s198 + $0x148] sm:$0xff] %vm871, %v863
        %914 = vst.msk [vmem:[%s198 + $0x150] sm:$0xff] %vm871, %v864
        %915 = vst.msk [vmem:[%s198 + $0x158] sm:$0xff] %vm871, %v865
        %916 = vst.msk [vmem:[%s198 + $0x160] sm:$0xff] %vm871, %v866
        %917 = vst.msk [vmem:[%s198 + $0x168] sm:$0xff] %vm871, %v867
        %918 = vst.msk [vmem:[%s198 + $0x170] sm:$0xff] %vm871, %v868
        %919 = vst.msk [vmem:[%s198 + $0x178] sm:$0xff] %vm871, %v869
        %920 = vst.msk [vmem:[%s198 + $0x180] sm:$0xff] %vm871, %v870
      $region40: #{cnn_forward.3} parent=31 // pred_fallthru
        _
      %p921 = scmp.eq.s32.totalorder %s19, 3
      // Predicated region
      $region41: #{cnn_forward.3} parent=31 // pred_check
        %p922 = pneg %p921
      $region42: #{cnn_forward.3} parent=31 // pred_check_branch
        %924 = sbr.rel (%p922) target = $region44
      $region43: #{cnn_forward.3} parent=31 // pred_region
        %v925 = vld [vmem:[%s198] sm:$0xff]
        %v926 = vld [vmem:[%s198 + $0x8] sm:$0xff]
        %v927 = vld [vmem:[%s198 + $0x10] sm:$0xff]
        %v928 = vld [vmem:[%s198 + $0x18] sm:$0xff]
        %v929 = vld [vmem:[%s198 + $0x20] sm:$0xff]
        %v930 = vld [vmem:[%s198 + $0x28] sm:$0xff]
        %v931 = vld [vmem:[%s198 + $0x30] sm:$0xff]
        %v932 = vld [vmem:[%s198 + $0x38] sm:$0xff]
        %v933 = vld [vmem:[%s198 + $0x40] sm:$0xff]
        %v934 = vld [vmem:[%s198 + $0x48] sm:$0xff]
        %v935 = vld [vmem:[%s198 + $0x50] sm:$0xff]
        %v936 = vld [vmem:[%s198 + $0x58] sm:$0xff]
        %v937 = vld [vmem:[%s198 + $0x60] sm:$0xff]
        %v938 = vld [vmem:[%s198 + $0x68] sm:$0xff]
        %v939 = vld [vmem:[%s198 + $0x70] sm:$0xff]
        %v940 = vld [vmem:[%s198 + $0x78] sm:$0xff]
        %v941 = vld [vmem:[%s198 + $0x80] sm:$0xff]
        %v942 = vld [vmem:[%s198 + $0x88] sm:$0xff]
        %v943 = vld [vmem:[%s198 + $0x90] sm:$0xff]
        %v944 = vld [vmem:[%s198 + $0x98] sm:$0xff]
        %v945 = vld [vmem:[%s198 + $0xa0] sm:$0xff]
        %v946 = vld [vmem:[%s198 + $0xa8] sm:$0xff]
        %v947 = vld [vmem:[%s198 + $0xb0] sm:$0xff]
        %v948 = vld [vmem:[%s198 + $0xb8] sm:$0xff]
        %v949 = vld [vmem:[%s198 + $0xc0] sm:$0xff]
        %v950 = vld [vmem:[%s198 + $0xc8] sm:$0xff]
        %v951 = vld [vmem:[%s198 + $0xd0] sm:$0xff]
        %v952 = vld [vmem:[%s198 + $0xd8] sm:$0xff]
        %v953 = vld [vmem:[%s198 + $0xe0] sm:$0xff]
        %v954 = vld [vmem:[%s198 + $0xe8] sm:$0xff]
        %v955 = vld [vmem:[%s198 + $0xf0] sm:$0xff]
        %v956 = vld [vmem:[%s198 + $0xf8] sm:$0xff]
        %v957 = vld [vmem:[%s198 + $0x100] sm:$0xff]
        %v958 = vld [vmem:[%s198 + $0x108] sm:$0xff]
        %v959 = vld [vmem:[%s198 + $0x110] sm:$0xff]
        %v960 = vld [vmem:[%s198 + $0x118] sm:$0xff]
        %v961 = vld [vmem:[%s198 + $0x120] sm:$0xff]
        %v962 = vld [vmem:[%s198 + $0x128] sm:$0xff]
        %v963 = vld [vmem:[%s198 + $0x130] sm:$0xff]
        %v964 = vld [vmem:[%s198 + $0x138] sm:$0xff]
        %v965 = vld [vmem:[%s198 + $0x140] sm:$0xff]
        %v966 = vld [vmem:[%s198 + $0x148] sm:$0xff]
        %v967 = vld [vmem:[%s198 + $0x150] sm:$0xff]
        %v968 = vld [vmem:[%s198 + $0x158] sm:$0xff]
        %v969 = vld [vmem:[%s198 + $0x160] sm:$0xff]
        %v970 = vld [vmem:[%s198 + $0x168] sm:$0xff]
        %v971 = vld [vmem:[%s198 + $0x170] sm:$0xff]
        %v972 = vld [vmem:[%s198 + $0x178] sm:$0xff]
        %v973 = vld [vmem:[%s198 + $0x180] sm:$0xff]
        %v974 = vld [vmem:[%s2] sm:$0x1]
        %v976 = vlaneseq
        %v977 = vshrl.u32 %v976, 7
        %v978 = vsub.s32 0, %v977
        %v979 = vrot.slane %v974, %v978
        %v981 = vadd.f32 %v925, %v979
        %v982 = vadd.f32 %v926, %v979
        %v983 = vadd.f32 %v927, %v979
        %v984 = vadd.f32 %v928, %v979
        %v985 = vadd.f32 %v929, %v979
        %v986 = vadd.f32 %v930, %v979
        %v987 = vadd.f32 %v931, %v979
        %v988 = vadd.f32 %v932, %v979
        %v989 = vadd.f32 %v933, %v979
        %v990 = vadd.f32 %v934, %v979
        %v991 = vadd.f32 %v935, %v979
        %v992 = vadd.f32 %v936, %v979
        %v993 = vadd.f32 %v937, %v979
        %v994 = vadd.f32 %v938, %v979
        %v995 = vadd.f32 %v939, %v979
        %v996 = vadd.f32 %v940, %v979
        %v997 = vadd.f32 %v941, %v979
        %v998 = vadd.f32 %v942, %v979
        %v999 = vadd.f32 %v943, %v979
        %v1000 = vadd.f32 %v944, %v979
        %v1001 = vadd.f32 %v945, %v979
        %v1002 = vadd.f32 %v946, %v979
        %v1003 = vadd.f32 %v947, %v979
        %v1004 = vadd.f32 %v948, %v979
        %v1005 = vadd.f32 %v949, %v979
        %v1006 = vadd.f32 %v950, %v979
        %v1007 = vadd.f32 %v951, %v979
        %v1008 = vadd.f32 %v952, %v979
        %v1009 = vadd.f32 %v953, %v979
        %v1010 = vadd.f32 %v954, %v979
        %v1011 = vadd.f32 %v955, %v979
        %v1012 = vadd.f32 %v956, %v979
        %v1013 = vadd.f32 %v957, %v979
        %v1014 = vadd.f32 %v958, %v979
        %v1015 = vadd.f32 %v959, %v979
        %v1016 = vadd.f32 %v960, %v979
        %v1017 = vadd.f32 %v961, %v979
        %v1018 = vadd.f32 %v962, %v979
        %v1019 = vadd.f32 %v963, %v979
        %v1020 = vadd.f32 %v964, %v979
        %v1021 = vadd.f32 %v965, %v979
        %v1022 = vadd.f32 %v966, %v979
        %v1023 = vadd.f32 %v967, %v979
        %v1024 = vadd.f32 %v968, %v979
        %v1025 = vadd.f32 %v969, %v979
        %v1026 = vadd.f32 %v970, %v979
        %v1027 = vadd.f32 %v971, %v979
        %v1028 = vadd.f32 %v972, %v979
        %v1029 = vadd.f32 %v973, %v979
        %v1030 = vmax.f32 %v981, 0.0
        %v1031 = vmax.f32 %v982, 0.0
        %v1032 = vmax.f32 %v983, 0.0
        %v1033 = vmax.f32 %v984, 0.0
        %v1034 = vmax.f32 %v985, 0.0
        %v1035 = vmax.f32 %v986, 0.0
        %v1036 = vmax.f32 %v987, 0.0
        %v1037 = vmax.f32 %v988, 0.0
        %v1038 = vmax.f32 %v989, 0.0
        %v1039 = vmax.f32 %v990, 0.0
        %v1040 = vmax.f32 %v991, 0.0
        %v1041 = vmax.f32 %v992, 0.0
        %v1042 = vmax.f32 %v993, 0.0
        %v1043 = vmax.f32 %v994, 0.0
        %v1044 = vmax.f32 %v995, 0.0
        %v1045 = vmax.f32 %v996, 0.0
        %v1046 = vmax.f32 %v997, 0.0
        %v1047 = vmax.f32 %v998, 0.0
        %v1048 = vmax.f32 %v999, 0.0
        %v1049 = vmax.f32 %v1000, 0.0
        %v1050 = vmax.f32 %v1001, 0.0
        %v1051 = vmax.f32 %v1002, 0.0
        %v1052 = vmax.f32 %v1003, 0.0
        %v1053 = vmax.f32 %v1004, 0.0
        %v1054 = vmax.f32 %v1005, 0.0
        %v1055 = vmax.f32 %v1006, 0.0
        %v1056 = vmax.f32 %v1007, 0.0
        %v1057 = vmax.f32 %v1008, 0.0
        %v1058 = vmax.f32 %v1009, 0.0
        %v1059 = vmax.f32 %v1010, 0.0
        %v1060 = vmax.f32 %v1011, 0.0
        %v1061 = vmax.f32 %v1012, 0.0
        %v1062 = vmax.f32 %v1013, 0.0
        %v1063 = vmax.f32 %v1014, 0.0
        %v1064 = vmax.f32 %v1015, 0.0
        %v1065 = vmax.f32 %v1016, 0.0
        %v1066 = vmax.f32 %v1017, 0.0
        %v1067 = vmax.f32 %v1018, 0.0
        %v1068 = vmax.f32 %v1019, 0.0
        %v1069 = vmax.f32 %v1020, 0.0
        %v1070 = vmax.f32 %v1021, 0.0
        %v1071 = vmax.f32 %v1022, 0.0
        %v1072 = vmax.f32 %v1023, 0.0
        %v1073 = vmax.f32 %v1024, 0.0
        %v1074 = vmax.f32 %v1025, 0.0
        %v1075 = vmax.f32 %v1026, 0.0
        %v1076 = vmax.f32 %v1027, 0.0
        %v1077 = vmax.f32 %v1028, 0.0
        %v1078 = vmax.f32 %v1029, 0.0
        %vm1079 = vcmask 130048
        %1080 = vst.msk [vmem:[%s198] sm:$0xff] %vm1079, %v1030
        %1081 = vst.msk [vmem:[%s198 + $0x8] sm:$0xff] %vm1079, %v1031
        %1082 = vst.msk [vmem:[%s198 + $0x10] sm:$0xff] %vm1079, %v1032
        %1083 = vst.msk [vmem:[%s198 + $0x18] sm:$0xff] %vm1079, %v1033
        %1084 = vst.msk [vmem:[%s198 + $0x20] sm:$0xff] %vm1079, %v1034
        %1085 = vst.msk [vmem:[%s198 + $0x28] sm:$0xff] %vm1079, %v1035
        %1086 = vst.msk [vmem:[%s198 + $0x30] sm:$0xff] %vm1079, %v1036
        %1087 = vst.msk [vmem:[%s198 + $0x38] sm:$0xff] %vm1079, %v1037
        %1088 = vst.msk [vmem:[%s198 + $0x40] sm:$0xff] %vm1079, %v1038
        %1089 = vst.msk [vmem:[%s198 + $0x48] sm:$0xff] %vm1079, %v1039
        %1090 = vst.msk [vmem:[%s198 + $0x50] sm:$0xff] %vm1079, %v1040
        %1091 = vst.msk [vmem:[%s198 + $0x58] sm:$0xff] %vm1079, %v1041
        %1092 = vst.msk [vmem:[%s198 + $0x60] sm:$0xff] %vm1079, %v1042
        %1093 = vst.msk [vmem:[%s198 + $0x68] sm:$0xff] %vm1079, %v1043
        %1094 = vst.msk [vmem:[%s198 + $0x70] sm:$0xff] %vm1079, %v1044
        %1095 = vst.msk [vmem:[%s198 + $0x78] sm:$0xff] %vm1079, %v1045
        %1096 = vst.msk [vmem:[%s198 + $0x80] sm:$0xff] %vm1079, %v1046
        %1097 = vst.msk [vmem:[%s198 + $0x88] sm:$0xff] %vm1079, %v1047
        %1098 = vst.msk [vmem:[%s198 + $0x90] sm:$0xff] %vm1079, %v1048
        %1099 = vst.msk [vmem:[%s198 + $0x98] sm:$0xff] %vm1079, %v1049
        %1100 = vst.msk [vmem:[%s198 + $0xa0] sm:$0xff] %vm1079, %v1050
        %1101 = vst.msk [vmem:[%s198 + $0xa8] sm:$0xff] %vm1079, %v1051
        %1102 = vst.msk [vmem:[%s198 + $0xb0] sm:$0xff] %vm1079, %v1052
        %1103 = vst.msk [vmem:[%s198 + $0xb8] sm:$0xff] %vm1079, %v1053
        %1104 = vst.msk [vmem:[%s198 + $0xc0] sm:$0xff] %vm1079, %v1054
        %1105 = vst.msk [vmem:[%s198 + $0xc8] sm:$0xff] %vm1079, %v1055
        %1106 = vst.msk [vmem:[%s198 + $0xd0] sm:$0xff] %vm1079, %v1056
        %1107 = vst.msk [vmem:[%s198 + $0xd8] sm:$0xff] %vm1079, %v1057
        %1108 = vst.msk [vmem:[%s198 + $0xe0] sm:$0xff] %vm1079, %v1058
        %1109 = vst.msk [vmem:[%s198 + $0xe8] sm:$0xff] %vm1079, %v1059
        %1110 = vst.msk [vmem:[%s198 + $0xf0] sm:$0xff] %vm1079, %v1060
        %1111 = vst.msk [vmem:[%s198 + $0xf8] sm:$0xff] %vm1079, %v1061
        %1112 = vst.msk [vmem:[%s198 + $0x100] sm:$0xff] %vm1079, %v1062
        %1113 = vst.msk [vmem:[%s198 + $0x108] sm:$0xff] %vm1079, %v1063
        %1114 = vst.msk [vmem:[%s198 + $0x110] sm:$0xff] %vm1079, %v1064
        %1115 = vst.msk [vmem:[%s198 + $0x118] sm:$0xff] %vm1079, %v1065
        %1116 = vst.msk [vmem:[%s198 + $0x120] sm:$0xff] %vm1079, %v1066
        %1117 = vst.msk [vmem:[%s198 + $0x128] sm:$0xff] %vm1079, %v1067
        %1118 = vst.msk [vmem:[%s198 + $0x130] sm:$0xff] %vm1079, %v1068
        %1119 = vst.msk [vmem:[%s198 + $0x138] sm:$0xff] %vm1079, %v1069
        %1120 = vst.msk [vmem:[%s198 + $0x140] sm:$0xff] %vm1079, %v1070
        %1121 = vst.msk [vmem:[%s198 + $0x148] sm:$0xff] %vm1079, %v1071
        %1122 = vst.msk [vmem:[%s198 + $0x150] sm:$0xff] %vm1079, %v1072
        %1123 = vst.msk [vmem:[%s198 + $0x158] sm:$0xff] %vm1079, %v1073
        %1124 = vst.msk [vmem:[%s198 + $0x160] sm:$0xff] %vm1079, %v1074
        %1125 = vst.msk [vmem:[%s198 + $0x168] sm:$0xff] %vm1079, %v1075
        %1126 = vst.msk [vmem:[%s198 + $0x170] sm:$0xff] %vm1079, %v1076
        %1127 = vst.msk [vmem:[%s198 + $0x178] sm:$0xff] %vm1079, %v1077
        %1128 = vst.msk [vmem:[%s198 + $0x180] sm:$0xff] %vm1079, %v1078
      $region44: #{cnn_forward.3} parent=31 // pred_fallthru
        _
      %s1129 = smul.u32 49, %s18
      %p1130 = scmp.lt.s32.totalorder %s1129, 48
      %s1131 = scalar_select %p1130, %s1129, 48
      %s1132 = smul.addr %s1131, 8
      %s1133 = scalar_lea.vmem %s3, %s1132
      // Predicated region
      $region45: #{cnn_forward.3} parent=31 // pred_check
        %p1134 = pneg %p114
      $region46: #{cnn_forward.3} parent=31 // pred_check_branch
        %1136 = sbr.rel (%p1134) target = $region48
      $region47: #{cnn_forward.3} parent=31 // pred_region
        %s1137 = smul.u32 49, %s18
      $region48: #{cnn_forward.3} parent=31 // pred_fallthru
        _
      // Predicated region
      $region49: #{cnn_forward.3} parent=31 // pred_check
        %p1138 = pneg %p114
      $region50: #{cnn_forward.3} parent=31 // pred_check_branch
        %1140 = sbr.rel (%p1138) target = $region52
      $region51: #{cnn_forward.3} parent=31 // pred_region
        %s1141 = smul.u32 49, %s18
        %p1142 = scmp.lt.s32.totalorder %s1141, 48
        %s1143 = scalar_select %p1142, %s1141, 48
        %s1144 = smul.addr %s1143, 8
        %s1145 = scalar_lea.vmem %s3, %s1144
      $region52: #{cnn_forward.3} parent=31 // pred_fallthru
        _
    $region32: #{cnn_forward.3} parent=5 // pred_fallthru
      _
    %p1146 = scmp.le.s32.totalorder 2, %s9
    // Predicated region
    $region53: #{cnn_forward.3} parent=5 // pred_check
      %p1147 = pneg %p1146
    $region54: #{cnn_forward.3} parent=5 // pred_check_branch
      %1149 = sbr.rel (%p1147) target = $region56
    $region55: #{cnn_forward.3} parent=5 // pred_region
      %s1150 = ssub.s32 %s9, 2
    $region56: #{cnn_forward.3} parent=5 // pred_fallthru
      _
  $region6: #{cnn_forward.3} parent=0 // loop_footer
    %s13 = sadd.s32 1, %s9
  $region7: #{cnn_forward.3} parent=0 // loop_footer_branch
    %8 = sbr.rel target = $region3
  $region8: #{cnn_forward.3} parent=0 // loop_exit
    _

// kernel: cnn_forward.4
$region0: #{cnn_forward.4}
  #allocation0 [shape = 'u32[]', space=smem, size = 0x4, offset = 0x4, fixed_abs, tag = 'smem constant byte address 0x4 - core index']
  #allocation1 [shape = 'u32[144,128]{1,0:T(1,128)}', space=vmem, size = 0x12000, scoped, tag = 'internal scratch']
  %s0 = inlined_call_operand.vmem [shape: f32[4,104,400], index: 0, kind: input, shape index: {}]
  %s1 = inlined_call_operand.vmem [shape: f32[400,32], index: 1, kind: input, shape index: {}]
  %s2 = inlined_call_operand.vmem [shape: f32[1,32], index: 2, kind: input, shape index: {}]
  %s3 = inlined_call_operand.vmem [shape: f32[104,32], index: 3, kind: output, shape index: {}]
  %s4 = sld [smem:[#allocation0]]
  $region57: #{cnn_forward.4} parent=0
    _
  %s6 = ssub.s32 1, %s4
  %s7 = scalar_select 0, %s6, %s4
  loop: start=0, step=1, limit=6
  $region2: #{cnn_forward.4} parent=0 // loop_pre_header
    _
  $region3: #{cnn_forward.4} parent=0 // loop_header
    %s9 = sphi 0, %s13
    %p10 = scmp.ge.s32.totalorder %s9, 6
    %s16 = sphi 0, %s28
    %s17 = sphi 0, %s24
    %s18 = sphi 0, %s16
    %s19 = sphi 0, %s17
    %s20 = sphi 0, %s18
    %s21 = sphi 0, %s19
    %s33 = sphi 0, %s35
    %s36 = sphi 0, %s33
    %s37 = sphi 0, %s36
    %s53 = sphi 0, %s37
    %s57 = sphi 0, %s57
    %s59 = sphi 0, %s57
    %s60 = sphi 0, %s59
    %s74 = sphi 0, %s60
    %s78 = sphi 0, %s78
    %s80 = sphi 0, %s78
    %s81 = sphi 0, %s80
    %s95 = sphi 0, %s81
    %s101 = sphi 0, %s103
    %s104 = sphi 0, %s101
    %s105 = sphi 0, %s104
    %s121 = sphi 0, %s105
  $region4: #{cnn_forward.4} parent=0 // loop_header_branch
    %12 = sbr.rel (%p10) target = $region8
  $region5: #{cnn_forward.4} parent=0 // loop_body
    %s14 = ssub.s32 %s9, 1
    %s15 = ssub.s32 %s9, 2
    %s22 = sadd.s32 1, %s17
    %p23 = scmp.ge.s32.totalorder %s22, 4
    %s24 = scalar_select %p23, 0, %s22
    %s25 = sadd.s32 1, %s16
    %s26 = scalar_select %p23, %s25, %s16
    %p27 = scmp.ge.s32.totalorder %s26, 1
    %s28 = scalar_select %p27, 0, %s26
    %s29 = ssub.s32 %s17, %s24
    %s30 = ssub.s32 %s16, %s28
    %s31 = sor.u32 %s29, %s30
    %p32 = scmp.eq.s32.totalorder %s31, 0
    %s34 = sadd.s32 %s33, 1
    %s35 = scalar_select %p32, %s33, %s34
    %p38 = pneg %p32
    %p39 = scmp.eq.s32.totalorder %s9, 3
    %p40 = por %p38, %p39
    %p41 = scmp.ne.s32.totalorder %s33, %s36
    %p42 = scmp.eq.s32.totalorder %s9, 0
    %p43 = por %p41, %p42
    %p44 = scmp.ne.s32.totalorder %s33, %s36
    %p45 = scmp.eq.s32.totalorder %s14, 3
    %p46 = por %p44, %p45
    %p47 = scmp.ne.s32.totalorder %s36, %s37
    %p48 = scmp.eq.s32.totalorder %s14, 0
    %p49 = por %p47, %p48
    %p50 = scmp.ne.s32.totalorder %s36, %s37
    %p51 = scmp.eq.s32.totalorder %s15, 3
    %p52 = por %p50, %p51
    %p54 = scmp.ne.s32.totalorder %s37, %s53
    %p55 = scmp.eq.s32.totalorder %s15, 0
    %p56 = por %p54, %p55
    %s58 = sadd.s32 %s57, 1
    %p61 = scmp.eq.s32.totalorder %s9, 3
    %p62 = scmp.ne.s32.totalorder %s57, %s59
    %p63 = scmp.eq.s32.totalorder %s9, 0
    %p64 = por %p62, %p63
    %p65 = scmp.ne.s32.totalorder %s57, %s59
    %p66 = scmp.eq.s32.totalorder %s14, 3
    %p67 = por %p65, %p66
    %p68 = scmp.ne.s32.totalorder %s59, %s60
    %p69 = scmp.eq.s32.totalorder %s14, 0
    %p70 = por %p68, %p69
    %p71 = scmp.ne.s32.totalorder %s59, %s60
    %p72 = scmp.eq.s32.totalorder %s15, 3
    %p73 = por %p71, %p72
    %p75 = scmp.ne.s32.totalorder %s60, %s74
    %p76 = scmp.eq.s32.totalorder %s15, 0
    %p77 = por %p75, %p76
    %s79 = sadd.s32 %s78, 1
    %p82 = scmp.eq.s32.totalorder %s9, 3
    %p83 = scmp.ne.s32.totalorder %s78, %s80
    %p84 = scmp.eq.s32.totalorder %s9, 0
    %p85 = por %p83, %p84
    %p86 = scmp.ne.s32.totalorder %s78, %s80
    %p87 = scmp.eq.s32.totalorder %s14, 3
    %p88 = por %p86, %p87
    %p89 = scmp.ne.s32.totalorder %s80, %s81
    %p90 = scmp.eq.s32.totalorder %s14, 0
    %p91 = por %p89, %p90
    %p92 = scmp.ne.s32.totalorder %s80, %s81
    %p93 = scmp.eq.s32.totalorder %s15, 3
    %p94 = por %p92, %p93
    %p96 = scmp.ne.s32.totalorder %s81, %s95
    %p97 = scmp.eq.s32.totalorder %s15, 0
    %p98 = por %p96, %p97
    %s99 = ssub.s32 %s16, %s28
    %p100 = scmp.eq.s32.totalorder %s99, 0
    %s102 = sadd.s32 %s101, 1
    %s103 = scalar_select %p100, %s101, %s102
    %p106 = pneg %p100
    %p107 = scmp.eq.s32.totalorder %s9, 3
    %p108 = por %p106, %p107
    %p109 = scmp.ne.s32.totalorder %s101, %s104
    %p110 = scmp.eq.s32.totalorder %s9, 0
    %p111 = por %p109, %p110
    %p112 = scmp.ne.s32.totalorder %s101, %s104
    %p113 = scmp.eq.s32.totalorder %s14, 3
    %p114 = por %p112, %p113
    %p115 = scmp.ne.s32.totalorder %s104, %s105
    %p116 = scmp.eq.s32.totalorder %s14, 0
    %p117 = por %p115, %p116
    %p118 = scmp.ne.s32.totalorder %s104, %s105
    %p119 = scmp.eq.s32.totalorder %s15, 3
    %p120 = por %p118, %p119
    %p122 = scmp.ne.s32.totalorder %s105, %s121
    %p123 = scmp.eq.s32.totalorder %s15, 0
    %p124 = por %p122, %p123
    %p125 = scmp.le.s32.totalorder 1, %s9
    %p126 = scmp.lt.s32.totalorder %s9, 5
    %p127 = pnand %p125, %p126
    %p128 = pneg %p127
    // Predicated region
    $region9: #{cnn_forward.4} parent=5 // pred_check
      _
    $region10: #{cnn_forward.4} parent=5 // pred_check_branch
      %130 = sbr.rel (%p127) target = $region12
    $region11: #{cnn_forward.4} parent=5 // pred_region
      %s131 = ssub.s32 %s9, 1
      // Predicated region
      $region13: #{cnn_forward.4} parent=11 // pred_check
        %p132 = pneg %p70
      $region14: #{cnn_forward.4} parent=11 // pred_check_branch
        %134 = sbr.rel (%p132) target = $region16
      $region15: #{cnn_forward.4} parent=11 // pred_region
        _
      $region16: #{cnn_forward.4} parent=11 // pred_fallthru
        _
      // Predicated region
      $region17: #{cnn_forward.4} parent=11 // pred_check
        %p135 = pneg %p91
      $region18: #{cnn_forward.4} parent=11 // pred_check_branch
        %137 = sbr.rel (%p135) target = $region20
      $region19: #{cnn_forward.4} parent=11 // pred_region
        _
      $region20: #{cnn_forward.4} parent=11 // pred_fallthru
        _
    $region12: #{cnn_forward.4} parent=5 // pred_fallthru
      _
    %p138 = scmp.lt.s32.totalorder %s9, 4
    // Predicated region
    $region21: #{cnn_forward.4} parent=5 // pred_check
      %p139 = pneg %p138
    $region22: #{cnn_forward.4} parent=5 // pred_check_branch
      %141 = sbr.rel (%p139) target = $region24
    $region23: #{cnn_forward.4} parent=5 // pred_region
      // Predicated region
      $region25: #{cnn_forward.4} parent=23 // pred_check
        %p142 = pneg %p43
      $region26: #{cnn_forward.4} parent=23 // pred_check_branch
        %144 = sbr.rel (%p142) target = $region28
      $region27: #{cnn_forward.4} parent=23 // pred_region
        %s145 = smul.u32 13, %s16
        %p146 = scmp.lt.s32.totalorder %s17, 3
        %s147 = scalar_select %p146, %s17, 3
        %p148 = scmp.lt.s32.totalorder %s145, 12
        %s149 = scalar_select %p148, %s145, 12
        %s150 = smul.addr %s149, 4
        %s151 = smul.addr %s147, 52
        %s152 = sadd.s32 %s150, %s151
        %s153 = smul.addr %s152, 8
        %s154 = scalar_lea.vmem %s0, %s153
        %s155 = smul.u32 13, %s16
      $region28: #{cnn_forward.4} parent=23 // pred_fallthru
        _
    $region24: #{cnn_forward.4} parent=5 // pred_fallthru
      _
    %p156 = scmp.le.s32.totalorder 1, %s9
    %p157 = scmp.lt.s32.totalorder %s9, 5
    %p158 = pnand %p156, %p157
    %p159 = pneg %p158
    // Predicated region
    $region29: #{cnn_forward.4} parent=5 // pred_check
      _
    $region30: #{cnn_forward.4} parent=5 // pred_check_branch
      %161 = sbr.rel (%p158) target = $region32
    $region31: #{cnn_forward.4} parent=5 // pred_region
      %s162 = ssub.s32 %s9, 1
      %s163 = smul.u32 13, %s18
      %p164 = scmp.lt.s32.totalorder %s19, 3
      %s165 = scalar_select %p164, %s19, 3
      %p166 = scmp.lt.s32.totalorder %s163, 12
      %s167 = scalar_select %p166, %s163, 12
      %s168 = smul.addr %s167, 4
      %s169 = smul.addr %s165, 52
      %s170 = sadd.s32 %s168, %s169
      %s171 = smul.addr %s170, 8
      %s172 = scalar_lea.vmem %s0, %s171
      %p173 = pneg %p49
      %p174 = pneg %p46
      %p175 = pneg %p70
      %p176 = pneg %p67
      %p177 = pneg %p91
      %p178 = pneg %p88
      %p179 = pneg %p117
      %p180 = pneg %p114
      %s181 = smul.u32 13, %s18
      %p182 = scmp.lt.s32.totalorder %s181, 12
      %s183 = scalar_select %p182, %s181, 12
      %s184 = smul.addr %s183, 8
      %s185 = scalar_lea.vmem %s3, %s184
      %s186 = smul.u32 13, %s18
      %p187 = scmp.lt.s32.totalorder %s19, 3
      %s188 = scalar_select %p187, %s19, 3
      %p189 = scmp.lt.s32.totalorder %s186, 12
      %s190 = scalar_select %p189, %s186, 12
      %s191 = smul.addr %s190, 4
      %s192 = smul.addr %s188, 52
      %s193 = sadd.s32 %s191, %s192
      %s194 = smul.addr %s193, 8
      %s195 = scalar_lea.vmem %s0, %s194
      %s196 = smul.u32 13, %s18
      %s197 = smul.u32 13, %s18
      %p198 = scmp.lt.s32.totalorder %s197, 12
      %s199 = scalar_select %p198, %s197, 12
      %s200 = smul.addr %s199, 8
      %s201 = scalar_lea.vmem %s3, %s200
      %s202 = smul.u32 13, %s18
      %v203 = vld [vmem:[%s195] sm:$0xff]
      %v204 = vld [vmem:[%s195 + $0x8] sm:$0xff]
      %v205 = vld [vmem:[%s195 + $0x10] sm:$0xff]
      %v206 = vld [vmem:[%s195 + $0x18] sm:$0xff]
      %v207 = vld [vmem:[%s195 + $0x20] sm:$0xff]
      %v208 = vld [vmem:[%s195 + $0x28] sm:$0xff]
      %v209 = vld [vmem:[%s195 + $0x30] sm:$0xff]
      %v210 = vld [vmem:[%s195 + $0x38] sm:$0xff]
      %v211 = vld [vmem:[%s195 + $0x40] sm:$0xff]
      %v212 = vld [vmem:[%s195 + $0x48] sm:$0xff]
      %v213 = vld [vmem:[%s195 + $0x50] sm:$0xff]
      %v214 = vld [vmem:[%s195 + $0x58] sm:$0xff]
      %v215 = vld [vmem:[%s195 + $0x60] sm:$0xff]
      %v216 = vld [vmem:[%s195 + $0x68] sm:$0xff]
      %v217 = vld [vmem:[%s195 + $0x70] sm:$0xff]
      %v218 = vld [vmem:[%s195 + $0x78] sm:$0xff]
      %v219 = vld [vmem:[%s195 + $0x80] sm:$0xff]
      %v220 = vld [vmem:[%s195 + $0x88] sm:$0xff]
      %v221 = vld [vmem:[%s195 + $0x90] sm:$0xff]
      %v222 = vld [vmem:[%s195 + $0x98] sm:$0xff]
      %v223 = vld [vmem:[%s195 + $0xa0] sm:$0xff]
      %v224 = vld [vmem:[%s195 + $0xa8] sm:$0xff]
      %v225 = vld [vmem:[%s195 + $0xb0] sm:$0xff]
      %v226 = vld [vmem:[%s195 + $0xb8] sm:$0xff]
      %v227 = vld [vmem:[%s195 + $0xc0] sm:$0xff]
      %v228 = vld [vmem:[%s195 + $0xc8] sm:$0xff]
      %v229 = vld [vmem:[%s195 + $0xd0] sm:$0xff]
      %v230 = vld [vmem:[%s195 + $0xd8] sm:$0xff]
      %v231 = vld [vmem:[%s195 + $0xe0] sm:$0xff]
      %v232 = vld [vmem:[%s195 + $0xe8] sm:$0xff]
      %v233 = vld [vmem:[%s195 + $0xf0] sm:$0xff]
      %v234 = vld [vmem:[%s195 + $0xf8] sm:$0xff]
      %v235 = vld [vmem:[%s195 + $0x100] sm:$0xff]
      %v236 = vld [vmem:[%s195 + $0x108] sm:$0xff]
      %v237 = vld [vmem:[%s195 + $0x110] sm:$0xff]
      %v238 = vld [vmem:[%s195 + $0x118] sm:$0xff]
      %v239 = vld [vmem:[%s195 + $0x120] sm:$0xff]
      %v240 = vld [vmem:[%s195 + $0x128] sm:$0xff]
      %v241 = vld [vmem:[%s195 + $0x130] sm:$0xff]
      %v242 = vld [vmem:[%s195 + $0x138] sm:$0xff]
      %v243 = vld [vmem:[%s195 + $0x140] sm:$0xff]
      %v244 = vld [vmem:[%s195 + $0x148] sm:$0xff]
      %v245 = vld [vmem:[%s195 + $0x150] sm:$0xff]
      %v246 = vld [vmem:[%s195 + $0x158] sm:$0xff]
      %v247 = vld [vmem:[%s195 + $0x160] sm:$0xff]
      %v248 = vld [vmem:[%s195 + $0x168] sm:$0xff]
      %v249 = vld [vmem:[%s195 + $0x170] sm:$0xff]
      %v250 = vld [vmem:[%s195 + $0x178] sm:$0xff]
      %v251 = vld [vmem:[%s195 + $0x180] sm:$0xff]
      %v252 = vld [vmem:[%s195 + $0x188] sm:$0xff]
      %v253 = vld [vmem:[%s195 + $0x190] sm:$0xff]
      %v254 = vld [vmem:[%s195 + $0x198] sm:$0xff]
      %v255 = vld [vmem:[%s1] sm:$0xff]
      %v256 = vld [vmem:[%s1 + $0x8] sm:$0xff]
      %v257 = vld [vmem:[%s1 + $0x10] sm:$0xff]
      %v258 = vld [vmem:[%s1 + $0x18] sm:$0xff]
      %v259 = vld [vmem:[%s1 + $0x20] sm:$0xff]
      %v260 = vld [vmem:[%s1 + $0x28] sm:$0xff]
      %v261 = vld [vmem:[%s1 + $0x30] sm:$0xff]
      %v262 = vld [vmem:[%s1 + $0x38] sm:$0xff]
      %v263 = vld [vmem:[%s1 + $0x40] sm:$0xff]
      %v264 = vld [vmem:[%s1 + $0x48] sm:$0xff]
      %v265 = vld [vmem:[%s1 + $0x50] sm:$0xff]
      %v266 = vld [vmem:[%s1 + $0x58] sm:$0xff]
      %v267 = vld [vmem:[%s1 + $0x60] sm:$0xff]
      %v268 = vld [vmem:[%s1 + $0x68] sm:$0xff]
      %v269 = vld [vmem:[%s1 + $0x70] sm:$0xff]
      %v270 = vld [vmem:[%s1 + $0x78] sm:$0xff]
      %v271 = vld [vmem:[%s1 + $0x80] sm:$0xff]
      %v272 = vld [vmem:[%s1 + $0x88] sm:$0xff]
      %v273 = vld [vmem:[%s1 + $0x90] sm:$0xff]
      %v274 = vld [vmem:[%s1 + $0x98] sm:$0xff]
      %v275 = vld [vmem:[%s1 + $0xa0] sm:$0xff]
      %v276 = vld [vmem:[%s1 + $0xa8] sm:$0xff]
      %v277 = vld [vmem:[%s1 + $0xb0] sm:$0xff]
      %v278 = vld [vmem:[%s1 + $0xb8] sm:$0xff]
      %v279 = vld [vmem:[%s1 + $0xc0] sm:$0xff]
      %v280 = vld [vmem:[%s1 + $0xc8] sm:$0xff]
      %v281 = vld [vmem:[%s1 + $0xd0] sm:$0xff]
      %v282 = vld [vmem:[%s1 + $0xd8] sm:$0xff]
      %v283 = vld [vmem:[%s1 + $0xe0] sm:$0xff]
      %v284 = vld [vmem:[%s1 + $0xe8] sm:$0xff]
      %v285 = vld [vmem:[%s1 + $0xf0] sm:$0xff]
      %v286 = vld [vmem:[%s1 + $0xf8] sm:$0xff]
      %v287 = vld [vmem:[%s1 + $0x100] sm:$0xff]
      %v288 = vld [vmem:[%s1 + $0x108] sm:$0xff]
      %v289 = vld [vmem:[%s1 + $0x110] sm:$0xff]
      %v290 = vld [vmem:[%s1 + $0x118] sm:$0xff]
      %v291 = vld [vmem:[%s1 + $0x120] sm:$0xff]
      %v292 = vld [vmem:[%s1 + $0x128] sm:$0xff]
      %v293 = vld [vmem:[%s1 + $0x130] sm:$0xff]
      %v294 = vld [vmem:[%s1 + $0x138] sm:$0xff]
      %v295 = vld [vmem:[%s1 + $0x140] sm:$0xff]
      %v296 = vld [vmem:[%s1 + $0x148] sm:$0xff]
      %v297 = vld [vmem:[%s1 + $0x150] sm:$0xff]
      %v298 = vld [vmem:[%s1 + $0x158] sm:$0xff]
      %v299 = vld [vmem:[%s1 + $0x160] sm:$0xff]
      %v300 = vld [vmem:[%s1 + $0x168] sm:$0xff]
      %v301 = vld [vmem:[%s1 + $0x170] sm:$0xff]
      %v302 = vld [vmem:[%s1 + $0x178] sm:$0xff]
      %v303 = vld [vmem:[%s1 + $0x180] sm:$0xff]
      %v304 = vld [vmem:[%s1 + $0x188] sm:$0xff]
      %vm305 = vcmask 130048
      %v307 = vsel %vm305, %v206, 0
      %v310 = vsel %vm305, %v210, 0
      %v313 = vsel %vm305, %v214, 0
      %v316 = vsel %vm305, %v218, 0
      %v319 = vsel %vm305, %v222, 0
      %v322 = vsel %vm305, %v226, 0
      %v325 = vsel %vm305, %v230, 0
      %v328 = vsel %vm305, %v234, 0
      %v331 = vsel %vm305, %v238, 0
      %v334 = vsel %vm305, %v242, 0
      %v337 = vsel %vm305, %v246, 0
      %v340 = vsel %vm305, %v250, 0
      %v343 = vsel %vm305, %v254, 0
      %345 = vmatprep.subr.mxu0 0.0
      %346 = vmatpush1.msra.mxu0 %v255
      %347 = vmatprep.subr.mxu0 0.0
      %348 = vmatpush1.msra.mxu0 %v256
      %349 = vmatprep.subr.mxu0 0.0
      %350 = vmatpush1.msra.mxu0 %v257
      %351 = vmatprep.subr.mxu0 0.0
      %352 = vmatpush1.msra.mxu0 %v258
      %353 = vmatprep.subr.mxu0 0.0
      %354 = vmatpush1.msra.mxu0 %v259
      %355 = vmatprep.subr.mxu0 0.0
      %356 = vmatpush1.msra.mxu0 %v260
      %357 = vmatprep.subr.mxu0 0.0
      %358 = vmatpush1.msra.mxu0 %v261
      %359 = vmatprep.subr.mxu0 0.0
      %360 = vmatpush1.msra.mxu0 %v262
      %361 = vmatprep.subr.mxu0 0.0
      %362 = vmatpush1.msra.mxu0 %v263
      %363 = vmatprep.subr.mxu0 0.0
      %364 = vmatpush1.msra.mxu0 %v264
      %365 = vmatprep.subr.mxu0 0.0
      %366 = vmatpush1.msra.mxu0 %v265
      %367 = vmatprep.subr.mxu0 0.0
      %368 = vmatpush1.msra.mxu0 %v266
      %369 = vmatprep.subr.mxu0 0.0
      %370 = vmatpush1.msra.mxu0 %v267
      %371 = vmatprep.subr.mxu0 0.0
      %372 = vmatpush1.msra.mxu0 %v268
      %373 = vmatprep.subr.mxu0 0.0
      %374 = vmatpush1.msra.mxu0 %v269
      %375 = vmatprep.subr.mxu0 0.0
      %376 = vmatpush1.msra.mxu0 %v270
      %377 = vmatprep.subr.mxu0 0.0
      %378 = vmatpush1.msra.mxu0 %v271
      %379 = vmatprep.subr.mxu0 0.0
      %380 = vmatpush1.msra.mxu0 %v272
      %381 = vmatprep.subr.mxu0 0.0
      %382 = vmatpush1.msra.mxu0 %v273
      %383 = vmatprep.subr.mxu0 0.0
      %384 = vmatpush1.msra.mxu0 %v274
      %385 = vmatprep.subr.mxu0 0.0
      %386 = vmatpush1.msra.mxu0 %v275
      %387 = vmatprep.subr.mxu0 0.0
      %388 = vmatpush1.msra.mxu0 %v276
      %389 = vmatprep.subr.mxu0 0.0
      %390 = vmatpush1.msra.mxu0 %v277
      %391 = vmatprep.subr.mxu0 0.0
      %392 = vmatpush1.msra.mxu0 %v278
      %393 = vmatprep.subr.mxu0 0.0
      %394 = vmatpush1.msra.mxu0 %v279
      %395 = vmatprep.subr.mxu0 0.0
      %396 = vmatpush1.msra.mxu0 %v280
      %397 = vmatprep.subr.mxu0 0.0
      %398 = vmatpush1.msra.mxu0 %v281
      %399 = vmatprep.subr.mxu0 0.0
      %400 = vmatpush1.msra.mxu0 %v282
      %401 = vmatprep.subr.mxu0 0.0
      %402 = vmatpush1.msra.mxu0 %v283
      %403 = vmatprep.subr.mxu0 0.0
      %404 = vmatpush1.msra.mxu0 %v284
      %405 = vmatprep.subr.mxu0 0.0
      %406 = vmatpush1.msra.mxu0 %v285
      %407 = vmatprep.subr.mxu0 0.0
      %408 = vmatpush1.msra.mxu0 %v286
      %409 = vmatprep.mubr.f32.mxu0 %v204
      %410 = vmatmul.mubr.f32.gmra.mrb[0].mxu0 %v203
      %v411 = vpop.f32.mrb[0].mxu0
      %v412 = vadd.f32 0.0, %v411
      %v413 = vpop.f32.mrb[0].mxu0
      %414 = vmatprep.mubr.f32.mxu0 %v208
      %415 = vmatmul.mubr.f32.gmra.mrb[0].mxu0 %v207
      %v416 = vpop.f32.mrb[0].mxu0
      %v417 = vadd.f32 0.0, %v416
      %v418 = vpop.f32.mrb[0].mxu0
      %419 = vmatprep.mubr.f32.mxu0 %v212
      %420 = vmatmul.mubr.f32.gmra.mrb[0].mxu0 %v211
      %v421 = vpop.f32.mrb[0].mxu0
      %v422 = vadd.f32 0.0, %v421
      %v423 = vpop.f32.mrb[0].mxu0
      %424 = vmatprep.mubr.f32.mxu0 %v216
      %425 = vmatmul.mubr.f32.gmra.mrb[0].mxu0 %v215
      %v426 = vpop.f32.mrb[0].mxu0
      %v427 = vadd.f32 0.0, %v426
      %v428 = vpop.f32.mrb[0].mxu0
      %429 = vmatprep.mubr.f32.mxu0 %v220
      %430 = vmatmul.mubr.f32.gmra.mrb[0].mxu0 %v219
      %v431 = vpop.f32.mrb[0].mxu0
      %v432 = vadd.f32 0.0, %v431
      %v433 = vpop.f32.mrb[0].mxu0
      %434 = vmatprep.mubr.f32.mxu0 %v224
      %435 = vmatmul.mubr.f32.gmra.mrb[0].mxu0 %v223
      %v436 = vpop.f32.mrb[0].mxu0
      %v437 = vadd.f32 0.0, %v436
      %v438 = vpop.f32.mrb[0].mxu0
      %439 = vmatprep.mubr.f32.mxu0 %v228
      %440 = vmatmul.mubr.f32.gmra.mrb[0].mxu0 %v227
      %v441 = vpop.f32.mrb[0].mxu0
      %v442 = vadd.f32 0.0, %v441
      %v443 = vpop.f32.mrb[0].mxu0
      %444 = vmatprep.mubr.f32.mxu0 %v232
      %445 = vmatmul.mubr.f32.gmra.mrb[0].mxu0 %v231
      %v446 = vpop.f32.mrb[0].mxu0
      %v447 = vadd.f32 0.0, %v446
      %v448 = vpop.f32.mrb[0].mxu0
      %449 = vmatprep.mubr.f32.mxu0 %v236
      %450 = vmatmul.mubr.f32.gmra.mrb[0].mxu0 %v235
      %v451 = vpop.f32.mrb[0].mxu0
      %v452 = vadd.f32 0.0, %v451
      %v453 = vpop.f32.mrb[0].mxu0
      %454 = vmatprep.mubr.f32.mxu0 %v240
      %455 = vmatmul.mubr.f32.gmra.mrb[0].mxu0 %v239
      %v456 = vpop.f32.mrb[0].mxu0
      %v457 = vadd.f32 0.0, %v456
      %v458 = vpop.f32.mrb[0].mxu0
      %459 = vmatprep.mubr.f32.mxu0 %v244
      %460 = vmatmul.mubr.f32.gmra.mrb[0].mxu0 %v243
      %v461 = vpop.f32.mrb[0].mxu0
      %v462 = vadd.f32 0.0, %v461
      %v463 = vpop.f32.mrb[0].mxu0
      %464 = vmatprep.mubr.f32.mxu0 %v248
      %465 = vmatmul.mubr.f32.gmra.mrb[0].mxu0 %v247
      %v466 = vpop.f32.mrb[0].mxu0
      %v467 = vadd.f32 0.0, %v466
      %v468 = vpop.f32.mrb[0].mxu0
      %469 = vmatprep.mubr.f32.mxu0 %v252
      %470 = vmatmul.mubr.f32.gmra.mrb[0].mxu0 %v251
      %v471 = vpop.f32.mrb[0].mxu0
      %v472 = vadd.f32 0.0, %v471
      %v473 = vpop.f32.mrb[0].mxu0
      %474 = vdwg.mxu0
      %475 = vmatprep.subr.mxu0 0.0
      %476 = vmatpush1.msra.mxu0 %v287
      %477 = vmatprep.subr.mxu0 0.0
      %478 = vmatpush1.msra.mxu0 %v288
      %479 = vmatprep.subr.mxu0 0.0
      %480 = vmatpush1.msra.mxu0 %v289
      %481 = vmatprep.subr.mxu0 0.0
      %482 = vmatpush1.msra.mxu0 %v290
      %483 = vmatprep.subr.mxu0 0.0
      %484 = vmatpush1.msra.mxu0 %v291
      %485 = vmatprep.subr.mxu0 0.0
      %486 = vmatpush1.msra.mxu0 %v292
      %487 = vmatprep.subr.mxu0 0.0
      %488 = vmatpush1.msra.mxu0 %v293
      %489 = vmatprep.subr.mxu0 0.0
      %490 = vmatpush1.msra.mxu0 %v294
      %491 = vmatprep.subr.mxu0 0.0
      %492 = vmatpush1.msra.mxu0 %v295
      %493 = vmatprep.subr.mxu0 0.0
      %494 = vmatpush1.msra.mxu0 %v296
      %495 = vmatprep.subr.mxu0 0.0
      %496 = vmatpush1.msra.mxu0 %v297
      %497 = vmatprep.subr.mxu0 0.0
      %498 = vmatpush1.msra.mxu0 %v298
      %499 = vmatprep.subr.mxu0 0.0
      %500 = vmatpush1.msra.mxu0 %v299
      %501 = vmatprep.subr.mxu0 0.0
      %502 = vmatpush1.msra.mxu0 %v300
      %503 = vmatprep.subr.mxu0 0.0
      %504 = vmatpush1.msra.mxu0 %v301
      %505 = vmatprep.subr.mxu0 0.0
      %506 = vmatpush1.msra.mxu0 %v302
      %507 = vmatprep.subr.mxu0 0.0
      %508 = vmatpush1.msra.mxu0 %v303
      %509 = vmatprep.subr.mxu0 0.0
      %510 = vmatpush1.msra.mxu0 %v304
      %511 = vmatprep.subr.mxu0 0.0
      %512 = vmatpush1.msra.mxu0 0.0
      %513 = vmatprep.subr.mxu0 0.0
      %514 = vmatpush1.msra.mxu0 0.0
      %515 = vmatprep.subr.mxu0 0.0
      %516 = vmatpush1.msra.mxu0 0.0
      %517 = vmatprep.subr.mxu0 0.0
      %518 = vmatpush1.msra.mxu0 0.0
      %519 = vmatprep.subr.mxu0 0.0
      %520 = vmatpush1.msra.mxu0 0.0
      %521 = vmatprep.subr.mxu0 0.0
      %522 = vmatpush1.msra.mxu0 0.0
      %523 = vmatprep.subr.mxu0 0.0
      %524 = vmatpush1.msra.mxu0 0.0
      %525 = vmatprep.subr.mxu0 0.0
      %526 = vmatpush1.msra.mxu0 0.0
      %527 = vmatprep.subr.mxu0 0.0
      %528 = vmatpush1.msra.mxu0 0.0
      %529 = vmatprep.subr.mxu0 0.0
      %530 = vmatpush1.msra.mxu0 0.0
      %531 = vmatprep.subr.mxu0 0.0
      %532 = vmatpush1.msra.mxu0 0.0
      %533 = vmatprep.subr.mxu0 0.0
      %534 = vmatpush1.msra.mxu0 0.0
      %535 = vmatprep.subr.mxu0 0.0
      %536 = vmatpush1.msra.mxu0 0.0
      %537 = vmatprep.subr.mxu0 0.0
      %538 = vmatpush1.msra.mxu0 0.0
      %539 = vmatprep.mubr.f32.mxu0 %v307
      %540 = vmatmul.mubr.f32.gmra.mrb[0].mxu0 %v205
      %v541 = vpop.f32.mrb[0].mxu0
      %v542 = vadd.f32 %v412, %v541
      %v543 = vpop.f32.mrb[0].mxu0
      %544 = vmatprep.mubr.f32.mxu0 %v310
      %545 = vmatmul.mubr.f32.gmra.mrb[0].mxu0 %v209
      %v546 = vpop.f32.mrb[0].mxu0
      %v547 = vadd.f32 %v417, %v546
      %v548 = vpop.f32.mrb[0].mxu0
      %549 = vmatprep.mubr.f32.mxu0 %v313
      %550 = vmatmul.mubr.f32.gmra.mrb[0].mxu0 %v213
      %v551 = vpop.f32.mrb[0].mxu0
      %v552 = vadd.f32 %v422, %v551
      %v553 = vpop.f32.mrb[0].mxu0
      %554 = vmatprep.mubr.f32.mxu0 %v316
      %555 = vmatmul.mubr.f32.gmra.mrb[0].mxu0 %v217
      %v556 = vpop.f32.mrb[0].mxu0
      %v557 = vadd.f32 %v427, %v556
      %v558 = vpop.f32.mrb[0].mxu0
      %559 = vmatprep.mubr.f32.mxu0 %v319
      %560 = vmatmul.mubr.f32.gmra.mrb[0].mxu0 %v221
      %v561 = vpop.f32.mrb[0].mxu0
      %v562 = vadd.f32 %v432, %v561
      %v563 = vpop.f32.mrb[0].mxu0
      %564 = vmatprep.mubr.f32.mxu0 %v322
      %565 = vmatmul.mubr.f32.gmra.mrb[0].mxu0 %v225
      %v566 = vpop.f32.mrb[0].mxu0
      %v567 = vadd.f32 %v437, %v566
      %v568 = vpop.f32.mrb[0].mxu0
      %569 = vmatprep.mubr.f32.mxu0 %v325
      %570 = vmatmul.mubr.f32.gmra.mrb[0].mxu0 %v229
      %v571 = vpop.f32.mrb[0].mxu0
      %v572 = vadd.f32 %v442, %v571
      %v573 = vpop.f32.mrb[0].mxu0
      %574 = vmatprep.mubr.f32.mxu0 %v328
      %575 = vmatmul.mubr.f32.gmra.mrb[0].mxu0 %v233
      %v576 = vpop.f32.mrb[0].mxu0
      %v577 = vadd.f32 %v447, %v576
      %v578 = vpop.f32.mrb[0].mxu0
      %579 = vmatprep.mubr.f32.mxu0 %v331
      %580 = vmatmul.mubr.f32.gmra.mrb[0].mxu0 %v237
      %v581 = vpop.f32.mrb[0].mxu0
      %v582 = vadd.f32 %v452, %v581
      %v583 = vpop.f32.mrb[0].mxu0
      %584 = vmatprep.mubr.f32.mxu0 %v334
      %585 = vmatmul.mubr.f32.gmra.mrb[0].mxu0 %v241
      %v586 = vpop.f32.mrb[0].mxu0
      %v587 = vadd.f32 %v457, %v586
      %v588 = vpop.f32.mrb[0].mxu0
      %589 = vmatprep.mubr.f32.mxu0 %v337
      %590 = vmatmul.mubr.f32.gmra.mrb[0].mxu0 %v245
      %v591 = vpop.f32.mrb[0].mxu0
      %v592 = vadd.f32 %v462, %v591
      %v593 = vpop.f32.mrb[0].mxu0
      %594 = vmatprep.mubr.f32.mxu0 %v340
      %595 = vmatmul.mubr.f32.gmra.mrb[0].mxu0 %v249
      %v596 = vpop.f32.mrb[0].mxu0
      %v597 = vadd.f32 %v467, %v596
      %v598 = vpop.f32.mrb[0].mxu0
      %599 = vmatprep.mubr.f32.mxu0 %v343
      %600 = vmatmul.mubr.f32.gmra.mrb[0].mxu0 %v253
      %v601 = vpop.f32.mrb[0].mxu0
      %v602 = vadd.f32 %v472, %v601
      %v603 = vpop.f32.mrb[0].mxu0
      %604 = vdwg.mxu0
      %p605 = scmp.eq.s32.totalorder %s19, 0
      // Predicated region
      $region33: #{cnn_forward.4} parent=31 // pred_check
        %p606 = pneg %p605
      $region34: #{cnn_forward.4} parent=31 // pred_check_branch
        %608 = sbr.rel (%p606) target = $region36
      $region35: #{cnn_forward.4} parent=31 // pred_region
        %vm609 = vcmask 261120
        %610 = vst.msk [vmem:[%s201] sm:$0xff] %vm609, %v542
        %611 = vst.msk [vmem:[%s201 + $0x8] sm:$0xff] %vm609, %v547
        %612 = vst.msk [vmem:[%s201 + $0x10] sm:$0xff] %vm609, %v552
        %613 = vst.msk [vmem:[%s201 + $0x18] sm:$0xff] %vm609, %v557
        %614 = vst.msk [vmem:[%s201 + $0x20] sm:$0xff] %vm609, %v562
        %615 = vst.msk [vmem:[%s201 + $0x28] sm:$0xff] %vm609, %v567
        %616 = vst.msk [vmem:[%s201 + $0x30] sm:$0xff] %vm609, %v572
        %617 = vst.msk [vmem:[%s201 + $0x38] sm:$0xff] %vm609, %v577
        %618 = vst.msk [vmem:[%s201 + $0x40] sm:$0xff] %vm609, %v582
        %619 = vst.msk [vmem:[%s201 + $0x48] sm:$0xff] %vm609, %v587
        %620 = vst.msk [vmem:[%s201 + $0x50] sm:$0xff] %vm609, %v592
        %621 = vst.msk [vmem:[%s201 + $0x58] sm:$0xff] %vm609, %v597
        %622 = vst.msk [vmem:[%s201 + $0x60] sm:$0xff] %vm609, %v602
      $region36: #{cnn_forward.4} parent=31 // pred_fallthru
        _
      %p623 = scmp.gt.s32.totalorder %s19, 0
      // Predicated region
      $region37: #{cnn_forward.4} parent=31 // pred_check
        %p624 = pneg %p623
      $region38: #{cnn_forward.4} parent=31 // pred_check_branch
        %626 = sbr.rel (%p624) target = $region40
      $region39: #{cnn_forward.4} parent=31 // pred_region
        %v627 = vld [vmem:[%s201] sm:$0xff]
        %v628 = vld [vmem:[%s201 + $0x8] sm:$0xff]
        %v629 = vld [vmem:[%s201 + $0x10] sm:$0xff]
        %v630 = vld [vmem:[%s201 + $0x18] sm:$0xff]
        %v631 = vld [vmem:[%s201 + $0x20] sm:$0xff]
        %v632 = vld [vmem:[%s201 + $0x28] sm:$0xff]
        %v633 = vld [vmem:[%s201 + $0x30] sm:$0xff]
        %v634 = vld [vmem:[%s201 + $0x38] sm:$0xff]
        %v635 = vld [vmem:[%s201 + $0x40] sm:$0xff]
        %v636 = vld [vmem:[%s201 + $0x48] sm:$0xff]
        %v637 = vld [vmem:[%s201 + $0x50] sm:$0xff]
        %v638 = vld [vmem:[%s201 + $0x58] sm:$0xff]
        %v639 = vld [vmem:[%s201 + $0x60] sm:$0xff]
        %v640 = vmax.f32 %v627, %v542
        %v641 = vmax.f32 %v628, %v547
        %v642 = vmax.f32 %v629, %v552
        %v643 = vmax.f32 %v630, %v557
        %v644 = vmax.f32 %v631, %v562
        %v645 = vmax.f32 %v632, %v567
        %v646 = vmax.f32 %v633, %v572
        %v647 = vmax.f32 %v634, %v577
        %v648 = vmax.f32 %v635, %v582
        %v649 = vmax.f32 %v636, %v587
        %v650 = vmax.f32 %v637, %v592
        %v651 = vmax.f32 %v638, %v597
        %v652 = vmax.f32 %v639, %v602
        %vm653 = vcmask 261120
        %654 = vst.msk [vmem:[%s201] sm:$0xff] %vm653, %v640
        %655 = vst.msk [vmem:[%s201 + $0x8] sm:$0xff] %vm653, %v641
        %656 = vst.msk [vmem:[%s201 + $0x10] sm:$0xff] %vm653, %v642
        %657 = vst.msk [vmem:[%s201 + $0x18] sm:$0xff] %vm653, %v643
        %658 = vst.msk [vmem:[%s201 + $0x20] sm:$0xff] %vm653, %v644
        %659 = vst.msk [vmem:[%s201 + $0x28] sm:$0xff] %vm653, %v645
        %660 = vst.msk [vmem:[%s201 + $0x30] sm:$0xff] %vm653, %v646
        %661 = vst.msk [vmem:[%s201 + $0x38] sm:$0xff] %vm653, %v647
        %662 = vst.msk [vmem:[%s201 + $0x40] sm:$0xff] %vm653, %v648
        %663 = vst.msk [vmem:[%s201 + $0x48] sm:$0xff] %vm653, %v649
        %664 = vst.msk [vmem:[%s201 + $0x50] sm:$0xff] %vm653, %v650
        %665 = vst.msk [vmem:[%s201 + $0x58] sm:$0xff] %vm653, %v651
        %666 = vst.msk [vmem:[%s201 + $0x60] sm:$0xff] %vm653, %v652
      $region40: #{cnn_forward.4} parent=31 // pred_fallthru
        _
      %p667 = scmp.eq.s32.totalorder %s19, 3
      // Predicated region
      $region41: #{cnn_forward.4} parent=31 // pred_check
        %p668 = pneg %p667
      $region42: #{cnn_forward.4} parent=31 // pred_check_branch
        %670 = sbr.rel (%p668) target = $region44
      $region43: #{cnn_forward.4} parent=31 // pred_region
        %v671 = vld [vmem:[%s201] sm:$0xff]
        %v672 = vld [vmem:[%s201 + $0x8] sm:$0xff]
        %v673 = vld [vmem:[%s201 + $0x10] sm:$0xff]
        %v674 = vld [vmem:[%s201 + $0x18] sm:$0xff]
        %v675 = vld [vmem:[%s201 + $0x20] sm:$0xff]
        %v676 = vld [vmem:[%s201 + $0x28] sm:$0xff]
        %v677 = vld [vmem:[%s201 + $0x30] sm:$0xff]
        %v678 = vld [vmem:[%s201 + $0x38] sm:$0xff]
        %v679 = vld [vmem:[%s201 + $0x40] sm:$0xff]
        %v680 = vld [vmem:[%s201 + $0x48] sm:$0xff]
        %v681 = vld [vmem:[%s201 + $0x50] sm:$0xff]
        %v682 = vld [vmem:[%s201 + $0x58] sm:$0xff]
        %v683 = vld [vmem:[%s201 + $0x60] sm:$0xff]
        %v684 = vld [vmem:[%s2] sm:$0x1]
        %v686 = vlaneseq
        %v687 = vshrl.u32 %v686, 7
        %v688 = vsub.s32 0, %v687
        %v689 = vrot.slane %v684, %v688
        %v691 = vadd.f32 %v671, %v689
        %v692 = vadd.f32 %v672, %v689
        %v693 = vadd.f32 %v673, %v689
        %v694 = vadd.f32 %v674, %v689
        %v695 = vadd.f32 %v675, %v689
        %v696 = vadd.f32 %v676, %v689
        %v697 = vadd.f32 %v677, %v689
        %v698 = vadd.f32 %v678, %v689
        %v699 = vadd.f32 %v679, %v689
        %v700 = vadd.f32 %v680, %v689
        %v701 = vadd.f32 %v681, %v689
        %v702 = vadd.f32 %v682, %v689
        %v703 = vadd.f32 %v683, %v689
        %v704 = vmax.f32 %v691, 0.0
        %v705 = vmax.f32 %v692, 0.0
        %v706 = vmax.f32 %v693, 0.0
        %v707 = vmax.f32 %v694, 0.0
        %v708 = vmax.f32 %v695, 0.0
        %v709 = vmax.f32 %v696, 0.0
        %v710 = vmax.f32 %v697, 0.0
        %v711 = vmax.f32 %v698, 0.0
        %v712 = vmax.f32 %v699, 0.0
        %v713 = vmax.f32 %v700, 0.0
        %v714 = vmax.f32 %v701, 0.0
        %v715 = vmax.f32 %v702, 0.0
        %v716 = vmax.f32 %v703, 0.0
        %vm717 = vcmask 261120
        %718 = vst.msk [vmem:[%s201] sm:$0xff] %vm717, %v704
        %719 = vst.msk [vmem:[%s201 + $0x8] sm:$0xff] %vm717, %v705
        %720 = vst.msk [vmem:[%s201 + $0x10] sm:$0xff] %vm717, %v706
        %721 = vst.msk [vmem:[%s201 + $0x18] sm:$0xff] %vm717, %v707
        %722 = vst.msk [vmem:[%s201 + $0x20] sm:$0xff] %vm717, %v708
        %723 = vst.msk [vmem:[%s201 + $0x28] sm:$0xff] %vm717, %v709
        %724 = vst.msk [vmem:[%s201 + $0x30] sm:$0xff] %vm717, %v710
        %725 = vst.msk [vmem:[%s201 + $0x38] sm:$0xff] %vm717, %v711
        %726 = vst.msk [vmem:[%s201 + $0x40] sm:$0xff] %vm717, %v712
        %727 = vst.msk [vmem:[%s201 + $0x48] sm:$0xff] %vm717, %v713
        %728 = vst.msk [vmem:[%s201 + $0x50] sm:$0xff] %vm717, %v714
        %729 = vst.msk [vmem:[%s201 + $0x58] sm:$0xff] %vm717, %v715
        %730 = vst.msk [vmem:[%s201 + $0x60] sm:$0xff] %vm717, %v716
      $region44: #{cnn_forward.4} parent=31 // pred_fallthru
        _
      %s731 = smul.u32 13, %s18
      %p732 = scmp.lt.s32.totalorder %s731, 12
      %s733 = scalar_select %p732, %s731, 12
      %s734 = smul.addr %s733, 8
      %s735 = scalar_lea.vmem %s3, %s734
      // Predicated region
      $region45: #{cnn_forward.4} parent=31 // pred_check
        %p736 = pneg %p114
      $region46: #{cnn_forward.4} parent=31 // pred_check_branch
        %738 = sbr.rel (%p736) target = $region48
      $region47: #{cnn_forward.4} parent=31 // pred_region
        %s739 = smul.u32 13, %s18
      $region48: #{cnn_forward.4} parent=31 // pred_fallthru
        _
      // Predicated region
      $region49: #{cnn_forward.4} parent=31 // pred_check
        %p740 = pneg %p114
      $region50: #{cnn_forward.4} parent=31 // pred_check_branch
        %742 = sbr.rel (%p740) target = $region52
      $region51: #{cnn_forward.4} parent=31 // pred_region
        %s743 = smul.u32 13, %s18
        %p744 = scmp.lt.s32.totalorder %s743, 12
        %s745 = scalar_select %p744, %s743, 12
        %s746 = smul.addr %s745, 8
        %s747 = scalar_lea.vmem %s3, %s746
      $region52: #{cnn_forward.4} parent=31 // pred_fallthru
        _
    $region32: #{cnn_forward.4} parent=5 // pred_fallthru
      _
    %p748 = scmp.le.s32.totalorder 2, %s9
    // Predicated region
    $region53: #{cnn_forward.4} parent=5 // pred_check
      %p749 = pneg %p748
    $region54: #{cnn_forward.4} parent=5 // pred_check_branch
      %751 = sbr.rel (%p749) target = $region56
    $region55: #{cnn_forward.4} parent=5 // pred_region
      %s752 = ssub.s32 %s9, 2
    $region56: #{cnn_forward.4} parent=5 // pred_fallthru
      _
  $region6: #{cnn_forward.4} parent=0 // loop_footer
    %s13 = sadd.s32 1, %s9
  $region7: #{cnn_forward.4} parent=0 // loop_footer_branch
    %8 = sbr.rel target = $region3
  $region8: #{cnn_forward.4} parent=0 // loop_exit
    _

// kernel: cnn_forward.5
$region0: #{cnn_forward.5}
  #allocation0 [shape = 'u32[]', space=smem, size = 0x4, offset = 0x4, fixed_abs, tag = 'smem constant byte address 0x4 - core index']
  #allocation1 [shape = 'u32[144,128]{1,0:T(1,128)}', space=vmem, size = 0x12000, scoped, tag = 'internal scratch']
  %s0 = inlined_call_operand.vmem [shape: f32[2,1568], index: 0, kind: input, shape index: {}]
  %s1 = inlined_call_operand.vmem [shape: f32[1568,128], index: 1, kind: input, shape index: {}]
  %s2 = inlined_call_operand.vmem [shape: f32[1,128], index: 2, kind: input, shape index: {}]
  %s3 = inlined_call_operand.hbm [shape: f32[2,128], index: 3, kind: output, shape index: {}]
  %s4 = sld [smem:[#allocation0]]
  $region22: #{cnn_forward.5} parent=0
    _
  %s6 = ssub.s32 1, %s4
  %s7 = scalar_select 0, %s6, %s4
  $region1: #{cnn_forward.5} parent=0
    #allocation2 [shape = 'u8[1024]{0}', space=vmem, size = 0x400, scoped, tag = 'output window, operand 0, single buffered']
    #allocation3 [shape = 's32[1]{0}', space=sflag, size = 0x4, scoped, tag = 'scoped memory for cnn_forward.5']
    %8 = vsyncpa [#allocation3], 0
    // Predicated region
    $region2: #{cnn_forward.5} parent=1 // pred_check
      _
    $region3: #{cnn_forward.5} parent=1 // pred_check_branch
      %10 = sbr.rel (0) target = $region5
    $region4: #{cnn_forward.5} parent=1 // pred_region
      _
    $region5: #{cnn_forward.5} parent=1 // pred_fallthru
      _
    // Predicated region
    $region6: #{cnn_forward.5} parent=1 // pred_check
      _
    $region7: #{cnn_forward.5} parent=1 // pred_check_branch
      %12 = sbr.rel (0) target = $region9
    $region8: #{cnn_forward.5} parent=1 // pred_region
      _
    $region9: #{cnn_forward.5} parent=1 // pred_fallthru
      _
    // Predicated region
    $region10: #{cnn_forward.5} parent=1 // pred_check
      _
    $region11: #{cnn_forward.5} parent=1 // pred_check_branch
      %14 = sbr.rel (0) target = $region13
    $region12: #{cnn_forward.5} parent=1 // pred_region
      _
    $region13: #{cnn_forward.5} parent=1 // pred_fallthru
      _
    %v15 = vld [vmem:[%s0] sm:$0xff]
    %v16 = vld [vmem:[%s0 + $0x8] sm:$0xff]
    %v17 = vld [vmem:[%s0 + $0x10] sm:$0xff]
    %v18 = vld [vmem:[%s0 + $0x18] sm:$0x3]
    %v19 = vld [vmem:[%s1] sm:$0xff]
    %v20 = vld [vmem:[%s1 + $0x8] sm:$0xff]
    %v21 = vld [vmem:[%s1 + $0x10] sm:$0xff]
    %v22 = vld [vmem:[%s1 + $0x18] sm:$0xff]
    %v23 = vld [vmem:[%s1 + $0x20] sm:$0xff]
    %v24 = vld [vmem:[%s1 + $0x28] sm:$0xff]
    %v25 = vld [vmem:[%s1 + $0x30] sm:$0xff]
    %v26 = vld [vmem:[%s1 + $0x38] sm:$0xff]
    %v27 = vld [vmem:[%s1 + $0x40] sm:$0xff]
    %v28 = vld [vmem:[%s1 + $0x48] sm:$0xff]
    %v29 = vld [vmem:[%s1 + $0x50] sm:$0xff]
    %v30 = vld [vmem:[%s1 + $0x58] sm:$0xff]
    %v31 = vld [vmem:[%s1 + $0x60] sm:$0xff]
    %v32 = vld [vmem:[%s1 + $0x68] sm:$0xff]
    %v33 = vld [vmem:[%s1 + $0x70] sm:$0xff]
    %v34 = vld [vmem:[%s1 + $0x78] sm:$0xff]
    %v35 = vld [vmem:[%s1 + $0x80] sm:$0xff]
    %v36 = vld [vmem:[%s1 + $0x88] sm:$0xff]
    %v37 = vld [vmem:[%s1 + $0x90] sm:$0xff]
    %v38 = vld [vmem:[%s1 + $0x98] sm:$0xff]
    %v39 = vld [vmem:[%s1 + $0xa0] sm:$0xff]
    %v40 = vld [vmem:[%s1 + $0xa8] sm:$0xff]
    %v41 = vld [vmem:[%s1 + $0xb0] sm:$0xff]
    %v42 = vld [vmem:[%s1 + $0xb8] sm:$0xff]
    %v43 = vld [vmem:[%s1 + $0xc0] sm:$0xff]
    %v44 = vld [vmem:[%s1 + $0xc8] sm:$0xff]
    %v45 = vld [vmem:[%s1 + $0xd0] sm:$0xff]
    %v46 = vld [vmem:[%s1 + $0xd8] sm:$0xff]
    %v47 = vld [vmem:[%s1 + $0xe0] sm:$0xff]
    %v48 = vld [vmem:[%s1 + $0xe8] sm:$0xff]
    %v49 = vld [vmem:[%s1 + $0xf0] sm:$0xff]
    %v50 = vld [vmem:[%s1 + $0xf8] sm:$0xff]
    %v51 = vld [vmem:[%s1 + $0x100] sm:$0xff]
    %v52 = vld [vmem:[%s1 + $0x108] sm:$0xff]
    %v53 = vld [vmem:[%s1 + $0x110] sm:$0xff]
    %v54 = vld [vmem:[%s1 + $0x118] sm:$0xff]
    %v55 = vld [vmem:[%s1 + $0x120] sm:$0xff]
    %v56 = vld [vmem:[%s1 + $0x128] sm:$0xff]
    %v57 = vld [vmem:[%s1 + $0x130] sm:$0xff]
    %v58 = vld [vmem:[%s1 + $0x138] sm:$0xff]
    %v59 = vld [vmem:[%s1 + $0x140] sm:$0xff]
    %v60 = vld [vmem:[%s1 + $0x148] sm:$0xff]
    %v61 = vld [vmem:[%s1 + $0x150] sm:$0xff]
    %v62 = vld [vmem:[%s1 + $0x158] sm:$0xff]
    %v63 = vld [vmem:[%s1 + $0x160] sm:$0xff]
    %v64 = vld [vmem:[%s1 + $0x168] sm:$0xff]
    %v65 = vld [vmem:[%s1 + $0x170] sm:$0xff]
    %v66 = vld [vmem:[%s1 + $0x178] sm:$0xff]
    %v67 = vld [vmem:[%s1 + $0x180] sm:$0xff]
    %v68 = vld [vmem:[%s1 + $0x188] sm:$0xff]
    %v69 = vld [vmem:[%s1 + $0x190] sm:$0xff]
    %v70 = vld [vmem:[%s1 + $0x198] sm:$0xff]
    %v71 = vld [vmem:[%s1 + $0x1a0] sm:$0xff]
    %v72 = vld [vmem:[%s1 + $0x1a8] sm:$0xff]
    %v73 = vld [vmem:[%s1 + $0x1b0] sm:$0xff]
    %v74 = vld [vmem:[%s1 + $0x1b8] sm:$0xff]
    %v75 = vld [vmem:[%s1 + $0x1c0] sm:$0xff]
    %v76 = vld [vmem:[%s1 + $0x1c8] sm:$0xff]
    %v77 = vld [vmem:[%s1 + $0x1d0] sm:$0xff]
    %v78 = vld [vmem:[%s1 + $0x1d8] sm:$0xff]
    %v79 = vld [vmem:[%s1 + $0x1e0] sm:$0xff]
    %v80 = vld [vmem:[%s1 + $0x1e8] sm:$0xff]
    %v81 = vld [vmem:[%s1 + $0x1f0] sm:$0xff]
    %v82 = vld [vmem:[%s1 + $0x1f8] sm:$0xff]
    %v83 = vld [vmem:[%s1 + $0x200] sm:$0xff]
    %v84 = vld [vmem:[%s1 + $0x208] sm:$0xff]
    %v85 = vld [vmem:[%s1 + $0x210] sm:$0xff]
    %v86 = vld [vmem:[%s1 + $0x218] sm:$0xff]
    %v87 = vld [vmem:[%s1 + $0x220] sm:$0xff]
    %v88 = vld [vmem:[%s1 + $0x228] sm:$0xff]
    %v89 = vld [vmem:[%s1 + $0x230] sm:$0xff]
    %v90 = vld [vmem:[%s1 + $0x238] sm:$0xff]
    %v91 = vld [vmem:[%s1 + $0x240] sm:$0xff]
    %v92 = vld [vmem:[%s1 + $0x248] sm:$0xff]
    %v93 = vld [vmem:[%s1 + $0x250] sm:$0xff]
    %v94 = vld [vmem:[%s1 + $0x258] sm:$0xff]
    %v95 = vld [vmem:[%s1 + $0x260] sm:$0xff]
    %v96 = vld [vmem:[%s1 + $0x268] sm:$0xff]
    %v97 = vld [vmem:[%s1 + $0x270] sm:$0xff]
    %v98 = vld [vmem:[%s1 + $0x278] sm:$0xff]
    %v99 = vld [vmem:[%s1 + $0x280] sm:$0xff]
    %v100 = vld [vmem:[%s1 + $0x288] sm:$0xff]
    %v101 = vld [vmem:[%s1 + $0x290] sm:$0xff]
    %v102 = vld [vmem:[%s1 + $0x298] sm:$0xff]
    %v103 = vld [vmem:[%s1 + $0x2a0] sm:$0xff]
    %v104 = vld [vmem:[%s1 + $0x2a8] sm:$0xff]
    %v105 = vld [vmem:[%s1 + $0x2b0] sm:$0xff]
    %v106 = vld [vmem:[%s1 + $0x2b8] sm:$0xff]
    %v107 = vld [vmem:[%s1 + $0x2c0] sm:$0xff]
    %v108 = vld [vmem:[%s1 + $0x2c8] sm:$0xff]
    %v109 = vld [vmem:[%s1 + $0x2d0] sm:$0xff]
    %v110 = vld [vmem:[%s1 + $0x2d8] sm:$0xff]
    %v111 = vld [vmem:[%s1 + $0x2e0] sm:$0xff]
    %v112 = vld [vmem:[%s1 + $0x2e8] sm:$0xff]
    %v113 = vld [vmem:[%s1 + $0x2f0] sm:$0xff]
    %v114 = vld [vmem:[%s1 + $0x2f8] sm:$0xff]
    %v115 = vld [vmem:[%s1 + $0x300] sm:$0xff]
    %v116 = vld [vmem:[%s1 + $0x308] sm:$0xff]
    %v117 = vld [vmem:[%s1 + $0x310] sm:$0xff]
    %v118 = vld [vmem:[%s1 + $0x318] sm:$0xff]
    %v119 = vld [vmem:[%s1 + $0x320] sm:$0xff]
    %v120 = vld [vmem:[%s1 + $0x328] sm:$0xff]
    %v121 = vld [vmem:[%s1 + $0x330] sm:$0xff]
    %v122 = vld [vmem:[%s1 + $0x338] sm:$0xff]
    %v123 = vld [vmem:[%s1 + $0x340] sm:$0xff]
    %v124 = vld [vmem:[%s1 + $0x348] sm:$0xff]
    %v125 = vld [vmem:[%s1 + $0x350] sm:$0xff]
    %v126 = vld [vmem:[%s1 + $0x358] sm:$0xff]
    %v127 = vld [vmem:[%s1 + $0x360] sm:$0xff]
    %v128 = vld [vmem:[%s1 + $0x368] sm:$0xff]
    %v129 = vld [vmem:[%s1 + $0x370] sm:$0xff]
    %v130 = vld [vmem:[%s1 + $0x378] sm:$0xff]
    %v131 = vld [vmem:[%s1 + $0x380] sm:$0xff]
    %v132 = vld [vmem:[%s1 + $0x388] sm:$0xff]
    %v133 = vld [vmem:[%s1 + $0x390] sm:$0xff]
    %v134 = vld [vmem:[%s1 + $0x398] sm:$0xff]
    %v135 = vld [vmem:[%s1 + $0x3a0] sm:$0xff]
    %v136 = vld [vmem:[%s1 + $0x3a8] sm:$0xff]
    %v137 = vld [vmem:[%s1 + $0x3b0] sm:$0xff]
    %v138 = vld [vmem:[%s1 + $0x3b8] sm:$0xff]
    %v139 = vld [vmem:[%s1 + $0x3c0] sm:$0xff]
    %v140 = vld [vmem:[%s1 + $0x3c8] sm:$0xff]
    %v141 = vld [vmem:[%s1 + $0x3d0] sm:$0xff]
    %v142 = vld [vmem:[%s1 + $0x3d8] sm:$0xff]
    %v143 = vld [vmem:[%s1 + $0x3e0] sm:$0xff]
    %v144 = vld [vmem:[%s1 + $0x3e8] sm:$0xff]
    %v145 = vld [vmem:[%s1 + $0x3f0] sm:$0xff]
    %v146 = vld [vmem:[%s1 + $0x3f8] sm:$0xff]
    %v147 = vld [vmem:[%s1 + $0x400] sm:$0xff]
    %v148 = vld [vmem:[%s1 + $0x408] sm:$0xff]
    %v149 = vld [vmem:[%s1 + $0x410] sm:$0xff]
    %v150 = vld [vmem:[%s1 + $0x418] sm:$0xff]
    %v151 = vld [vmem:[%s1 + $0x420] sm:$0xff]
    %v152 = vld [vmem:[%s1 + $0x428] sm:$0xff]
    %v153 = vld [vmem:[%s1 + $0x430] sm:$0xff]
    %v154 = vld [vmem:[%s1 + $0x438] sm:$0xff]
    %v155 = vld [vmem:[%s1 + $0x440] sm:$0xff]
    %v156 = vld [vmem:[%s1 + $0x448] sm:$0xff]
    %v157 = vld [vmem:[%s1 + $0x450] sm:$0xff]
    %v158 = vld [vmem:[%s1 + $0x458] sm:$0xff]
    %v159 = vld [vmem:[%s1 + $0x460] sm:$0xff]
    %v160 = vld [vmem:[%s1 + $0x468] sm:$0xff]
    %v161 = vld [vmem:[%s1 + $0x470] sm:$0xff]
    %v162 = vld [vmem:[%s1 + $0x478] sm:$0xff]
    %v163 = vld [vmem:[%s1 + $0x480] sm:$0xff]
    %v164 = vld [vmem:[%s1 + $0x488] sm:$0xff]
    %v165 = vld [vmem:[%s1 + $0x490] sm:$0xff]
    %v166 = vld [vmem:[%s1 + $0x498] sm:$0xff]
    %v167 = vld [vmem:[%s1 + $0x4a0] sm:$0xff]
    %v168 = vld [vmem:[%s1 + $0x4a8] sm:$0xff]
    %v169 = vld [vmem:[%s1 + $0x4b0] sm:$0xff]
    %v170 = vld [vmem:[%s1 + $0x4b8] sm:$0xff]
    %v171 = vld [vmem:[%s1 + $0x4c0] sm:$0xff]
    %v172 = vld [vmem:[%s1 + $0x4c8] sm:$0xff]
    %v173 = vld [vmem:[%s1 + $0x4d0] sm:$0xff]
    %v174 = vld [vmem:[%s1 + $0x4d8] sm:$0xff]
    %v175 = vld [vmem:[%s1 + $0x4e0] sm:$0xff]
    %v176 = vld [vmem:[%s1 + $0x4e8] sm:$0xff]
    %v177 = vld [vmem:[%s1 + $0x4f0] sm:$0xff]
    %v178 = vld [vmem:[%s1 + $0x4f8] sm:$0xff]
    %v179 = vld [vmem:[%s1 + $0x500] sm:$0xff]
    %v180 = vld [vmem:[%s1 + $0x508] sm:$0xff]
    %v181 = vld [vmem:[%s1 + $0x510] sm:$0xff]
    %v182 = vld [vmem:[%s1 + $0x518] sm:$0xff]
    %v183 = vld [vmem:[%s1 + $0x520] sm:$0xff]
    %v184 = vld [vmem:[%s1 + $0x528] sm:$0xff]
    %v185 = vld [vmem:[%s1 + $0x530] sm:$0xff]
    %v186 = vld [vmem:[%s1 + $0x538] sm:$0xff]
    %v187 = vld [vmem:[%s1 + $0x540] sm:$0xff]
    %v188 = vld [vmem:[%s1 + $0x548] sm:$0xff]
    %v189 = vld [vmem:[%s1 + $0x550] sm:$0xff]
    %v190 = vld [vmem:[%s1 + $0x558] sm:$0xff]
    %v191 = vld [vmem:[%s1 + $0x560] sm:$0xff]
    %v192 = vld [vmem:[%s1 + $0x568] sm:$0xff]
    %v193 = vld [vmem:[%s1 + $0x570] sm:$0xff]
    %v194 = vld [vmem:[%s1 + $0x578] sm:$0xff]
    %v195 = vld [vmem:[%s1 + $0x580] sm:$0xff]
    %v196 = vld [vmem:[%s1 + $0x588] sm:$0xff]
    %v197 = vld [vmem:[%s1 + $0x590] sm:$0xff]
    %v198 = vld [vmem:[%s1 + $0x598] sm:$0xff]
    %v199 = vld [vmem:[%s1 + $0x5a0] sm:$0xff]
    %v200 = vld [vmem:[%s1 + $0x5a8] sm:$0xff]
    %v201 = vld [vmem:[%s1 + $0x5b0] sm:$0xff]
    %v202 = vld [vmem:[%s1 + $0x5b8] sm:$0xff]
    %v203 = vld [vmem:[%s1 + $0x5c0] sm:$0xff]
    %v204 = vld [vmem:[%s1 + $0x5c8] sm:$0xff]
    %v205 = vld [vmem:[%s1 + $0x5d0] sm:$0xff]
    %v206 = vld [vmem:[%s1 + $0x5d8] sm:$0xff]
    %v207 = vld [vmem:[%s1 + $0x5e0] sm:$0xff]
    %v208 = vld [vmem:[%s1 + $0x5e8] sm:$0xff]
    %v209 = vld [vmem:[%s1 + $0x5f0] sm:$0xff]
    %v210 = vld [vmem:[%s1 + $0x5f8] sm:$0xff]
    %v211 = vld [vmem:[%s1 + $0x600] sm:$0xff]
    %v212 = vld [vmem:[%s1 + $0x608] sm:$0xff]
    %v213 = vld [vmem:[%s1 + $0x610] sm:$0xff]
    %v214 = vld [vmem:[%s1 + $0x618] sm:$0xff]
    %v215 = vld [vmem:[%s2] sm:$0x1]
    %v217 = vlaneseq
    %v218 = vshrl.u32 %v217, 7
    %v219 = vsub.s32 0, %v218
    %v220 = vrot.slane %v215, %v219
    %v226 = vcombine.high %v15, %v15
    %v228 = vunpack.c.l.s4 1983009808
    %v229 = vunpack.c.0.s8 %v228
    %v230 = vlaneseq
    %v231 = vshrl.u32 %v230, 7
    %v232 = vsub.s32 %v229, %v231
    %v233 = vrot.slane %v15, %v232
    %v235 = vunpack.c.l.s4 1983009808
    %v236 = vunpack.c.0.s8 %v235
    %v237 = vlaneseq
    %v238 = vshrl.u32 %v237, 7
    %v239 = vsub.s32 %v236, %v238
    %v240 = vrot.slane %v226, %v239
    %v241 = vcombine.high %v233, %v233
    %v242 = vcombine.high %v240, %v240
    %v243 = vcombine.high %v16, %v16
    %v245 = vunpack.c.l.s4 1983009808
    %v246 = vunpack.c.0.s8 %v245
    %v247 = vlaneseq
    %v248 = vshrl.u32 %v247, 7
    %v249 = vsub.s32 %v246, %v248
    %v250 = vrot.slane %v16, %v249
    %v252 = vunpack.c.l.s4 1983009808
    %v253 = vunpack.c.0.s8 %v252
    %v254 = vlaneseq
    %v255 = vshrl.u32 %v254, 7
    %v256 = vsub.s32 %v253, %v255
    %v257 = vrot.slane %v243, %v256
    %v258 = vcombine.high %v250, %v250
    %v259 = vcombine.high %v257, %v257
    %v260 = vcombine.high %v17, %v17
    %v262 = vunpack.c.l.s4 1983009808
    %v263 = vunpack.c.0.s8 %v262
    %v264 = vlaneseq
    %v265 = vshrl.u32 %v264, 7
    %v266 = vsub.s32 %v263, %v265
    %v267 = vrot.slane %v17, %v266
    %v269 = vunpack.c.l.s4 1983009808
    %v270 = vunpack.c.0.s8 %v269
    %v271 = vlaneseq
    %v272 = vshrl.u32 %v271, 7
    %v273 = vsub.s32 %v270, %v272
    %v274 = vrot.slane %v260, %v273
    %v275 = vcombine.high %v267, %v267
    %v276 = vcombine.high %v274, %v274
    %v278 = vunpack.c.l.s4 1983009808
    %v279 = vunpack.c.0.s8 %v278
    %v280 = vlaneseq
    %v281 = vshrl.u32 %v280, 7
    %v282 = vsub.s32 %v279, %v281
    %v283 = vrot.slane %v18, %v282
    %vm296 = vcmask 261120
    %v297 = vsel %vm296, %v283, 0
    %299 = vmatprep.subr.mxu0 0.0
    %300 = vmatpush1.msra.mxu0 %v19
    %301 = vmatprep.subr.mxu0 0.0
    %302 = vmatpush1.msra.mxu0 %v20
    %303 = vmatprep.subr.mxu0 0.0
    %304 = vmatpush1.msra.mxu0 %v21
    %305 = vmatprep.subr.mxu0 0.0
    %306 = vmatpush1.msra.mxu0 %v22
    %307 = vmatprep.subr.mxu0 0.0
    %308 = vmatpush1.msra.mxu0 %v23
    %309 = vmatprep.subr.mxu0 0.0
    %310 = vmatpush1.msra.mxu0 %v24
    %311 = vmatprep.subr.mxu0 0.0
    %312 = vmatpush1.msra.mxu0 %v25
    %313 = vmatprep.subr.mxu0 0.0
    %314 = vmatpush1.msra.mxu0 %v26
    %315 = vmatprep.subr.mxu0 0.0
    %316 = vmatpush1.msra.mxu0 %v27
    %317 = vmatprep.subr.mxu0 0.0
    %318 = vmatpush1.msra.mxu0 %v28
    %319 = vmatprep.subr.mxu0 0.0
    %320 = vmatpush1.msra.mxu0 %v29
    %321 = vmatprep.subr.mxu0 0.0
    %322 = vmatpush1.msra.mxu0 %v30
    %323 = vmatprep.subr.mxu0 0.0
    %324 = vmatpush1.msra.mxu0 %v31
    %325 = vmatprep.subr.mxu0 0.0
    %326 = vmatpush1.msra.mxu0 %v32
    %327 = vmatprep.subr.mxu0 0.0
    %328 = vmatpush1.msra.mxu0 %v33
    %329 = vmatprep.subr.mxu0 0.0
    %330 = vmatpush1.msra.mxu0 %v34
    %331 = vmatprep.subr.mxu0 0.0
    %332 = vmatpush1.msra.mxu0 %v35
    %333 = vmatprep.subr.mxu0 0.0
    %334 = vmatpush1.msra.mxu0 %v36
    %335 = vmatprep.subr.mxu0 0.0
    %336 = vmatpush1.msra.mxu0 %v37
    %337 = vmatprep.subr.mxu0 0.0
    %338 = vmatpush1.msra.mxu0 %v38
    %339 = vmatprep.subr.mxu0 0.0
    %340 = vmatpush1.msra.mxu0 %v39
    %341 = vmatprep.subr.mxu0 0.0
    %342 = vmatpush1.msra.mxu0 %v40
    %343 = vmatprep.subr.mxu0 0.0
    %344 = vmatpush1.msra.mxu0 %v41
    %345 = vmatprep.subr.mxu0 0.0
    %346 = vmatpush1.msra.mxu0 %v42
    %347 = vmatprep.subr.mxu0 0.0
    %348 = vmatpush1.msra.mxu0 %v43
    %349 = vmatprep.subr.mxu0 0.0
    %350 = vmatpush1.msra.mxu0 %v44
    %351 = vmatprep.subr.mxu0 0.0
    %352 = vmatpush1.msra.mxu0 %v45
    %353 = vmatprep.subr.mxu0 0.0
    %354 = vmatpush1.msra.mxu0 %v46
    %355 = vmatprep.subr.mxu0 0.0
    %356 = vmatpush1.msra.mxu0 %v47
    %357 = vmatprep.subr.mxu0 0.0
    %358 = vmatpush1.msra.mxu0 %v48
    %359 = vmatprep.subr.mxu0 0.0
    %360 = vmatpush1.msra.mxu0 %v49
    %361 = vmatprep.subr.mxu0 0.0
    %362 = vmatpush1.msra.mxu0 %v50
    %363 = vmatprep.mubr.f32.mxu0 %v241
    %364 = vmatmul.mubr.f32.gmra.mrb[0].mxu0 %v233
    %v365 = vpop.f32.mrb[0].mxu0
    %v366 = vadd.f32 %v220, %v365
    %v367 = vpop.f32.mrb[0].mxu0
    %368 = vdwg.mxu0
    %369 = vmatprep.subr.mxu0 0.0
    %370 = vmatpush1.msra.mxu0 %v51
    %371 = vmatprep.subr.mxu0 0.0
    %372 = vmatpush1.msra.mxu0 %v52
    %373 = vmatprep.subr.mxu0 0.0
    %374 = vmatpush1.msra.mxu0 %v53
    %375 = vmatprep.subr.mxu0 0.0
    %376 = vmatpush1.msra.mxu0 %v54
    %377 = vmatprep.subr.mxu0 0.0
    %378 = vmatpush1.msra.mxu0 %v55
    %379 = vmatprep.subr.mxu0 0.0
    %380 = vmatpush1.msra.mxu0 %v56
    %381 = vmatprep.subr.mxu0 0.0
    %382 = vmatpush1.msra.mxu0 %v57
    %383 = vmatprep.subr.mxu0 0.0
    %384 = vmatpush1.msra.mxu0 %v58
    %385 = vmatprep.subr.mxu0 0.0
    %386 = vmatpush1.msra.mxu0 %v59
    %387 = vmatprep.subr.mxu0 0.0
    %388 = vmatpush1.msra.mxu0 %v60
    %389 = vmatprep.subr.mxu0 0.0
    %390 = vmatpush1.msra.mxu0 %v61
    %391 = vmatprep.subr.mxu0 0.0
    %392 = vmatpush1.msra.mxu0 %v62
    %393 = vmatprep.subr.mxu0 0.0
    %394 = vmatpush1.msra.mxu0 %v63
    %395 = vmatprep.subr.mxu0 0.0
    %396 = vmatpush1.msra.mxu0 %v64
    %397 = vmatprep.subr.mxu0 0.0
    %398 = vmatpush1.msra.mxu0 %v65
    %399 = vmatprep.subr.mxu0 0.0
    %400 = vmatpush1.msra.mxu0 %v66
    %401 = vmatprep.subr.mxu0 0.0
    %402 = vmatpush1.msra.mxu0 %v67
    %403 = vmatprep.subr.mxu0 0.0
    %404 = vmatpush1.msra.mxu0 %v68
    %405 = vmatprep.subr.mxu0 0.0
    %406 = vmatpush1.msra.mxu0 %v69
    %407 = vmatprep.subr.mxu0 0.0
    %408 = vmatpush1.msra.mxu0 %v70
    %409 = vmatprep.subr.mxu0 0.0
    %410 = vmatpush1.msra.mxu0 %v71
    %411 = vmatprep.subr.mxu0 0.0
    %412 = vmatpush1.msra.mxu0 %v72
    %413 = vmatprep.subr.mxu0 0.0
    %414 = vmatpush1.msra.mxu0 %v73
    %415 = vmatprep.subr.mxu0 0.0
    %416 = vmatpush1.msra.mxu0 %v74
    %417 = vmatprep.subr.mxu0 0.0
    %418 = vmatpush1.msra.mxu0 %v75
    %419 = vmatprep.subr.mxu0 0.0
    %420 = vmatpush1.msra.mxu0 %v76
    %421 = vmatprep.subr.mxu0 0.0
    %422 = vmatpush1.msra.mxu0 %v77
    %423 = vmatprep.subr.mxu0 0.0
    %424 = vmatpush1.msra.mxu0 %v78
    %425 = vmatprep.subr.mxu0 0.0
    %426 = vmatpush1.msra.mxu0 %v79
    %427 = vmatprep.subr.mxu0 0.0
    %428 = vmatpush1.msra.mxu0 %v80
    %429 = vmatprep.subr.mxu0 0.0
    %430 = vmatpush1.msra.mxu0 %v81
    %431 = vmatprep.subr.mxu0 0.0
    %432 = vmatpush1.msra.mxu0 %v82
    %433 = vmatprep.mubr.f32.mxu0 %v242
    %434 = vmatmul.mubr.f32.gmra.mrb[0].mxu0 %v240
    %v435 = vpop.f32.mrb[0].mxu0
    %v436 = vadd.f32 %v366, %v435
    %v437 = vpop.f32.mrb[0].mxu0
    %438 = vdwg.mxu0
    %439 = vmatprep.subr.mxu0 0.0
    %440 = vmatpush1.msra.mxu0 %v83
    %441 = vmatprep.subr.mxu0 0.0
    %442 = vmatpush1.msra.mxu0 %v84
    %443 = vmatprep.subr.mxu0 0.0
    %444 = vmatpush1.msra.mxu0 %v85
    %445 = vmatprep.subr.mxu0 0.0
    %446 = vmatpush1.msra.mxu0 %v86
    %447 = vmatprep.subr.mxu0 0.0
    %448 = vmatpush1.msra.mxu0 %v87
    %449 = vmatprep.subr.mxu0 0.0
    %450 = vmatpush1.msra.mxu0 %v88
    %451 = vmatprep.subr.mxu0 0.0
    %452 = vmatpush1.msra.mxu0 %v89
    %453 = vmatprep.subr.mxu0 0.0
    %454 = vmatpush1.msra.mxu0 %v90
    %455 = vmatprep.subr.mxu0 0.0
    %456 = vmatpush1.msra.mxu0 %v91
    %457 = vmatprep.subr.mxu0 0.0
    %458 = vmatpush1.msra.mxu0 %v92
    %459 = vmatprep.subr.mxu0 0.0
    %460 = vmatpush1.msra.mxu0 %v93
    %461 = vmatprep.subr.mxu0 0.0
    %462 = vmatpush1.msra.mxu0 %v94
    %463 = vmatprep.subr.mxu0 0.0
    %464 = vmatpush1.msra.mxu0 %v95
    %465 = vmatprep.subr.mxu0 0.0
    %466 = vmatpush1.msra.mxu0 %v96
    %467 = vmatprep.subr.mxu0 0.0
    %468 = vmatpush1.msra.mxu0 %v97
    %469 = vmatprep.subr.mxu0 0.0
    %470 = vmatpush1.msra.mxu0 %v98
    %471 = vmatprep.subr.mxu0 0.0
    %472 = vmatpush1.msra.mxu0 %v99
    %473 = vmatprep.subr.mxu0 0.0
    %474 = vmatpush1.msra.mxu0 %v100
    %475 = vmatprep.subr.mxu0 0.0
    %476 = vmatpush1.msra.mxu0 %v101
    %477 = vmatprep.subr.mxu0 0.0
    %478 = vmatpush1.msra.mxu0 %v102
    %479 = vmatprep.subr.mxu0 0.0
    %480 = vmatpush1.msra.mxu0 %v103
    %481 = vmatprep.subr.mxu0 0.0
    %482 = vmatpush1.msra.mxu0 %v104
    %483 = vmatprep.subr.mxu0 0.0
    %484 = vmatpush1.msra.mxu0 %v105
    %485 = vmatprep.subr.mxu0 0.0
    %486 = vmatpush1.msra.mxu0 %v106
    %487 = vmatprep.subr.mxu0 0.0
    %488 = vmatpush1.msra.mxu0 %v107
    %489 = vmatprep.subr.mxu0 0.0
    %490 = vmatpush1.msra.mxu0 %v108
    %491 = vmatprep.subr.mxu0 0.0
    %492 = vmatpush1.msra.mxu0 %v109
    %493 = vmatprep.subr.mxu0 0.0
    %494 = vmatpush1.msra.mxu0 %v110
    %495 = vmatprep.subr.mxu0 0.0
    %496 = vmatpush1.msra.mxu0 %v111
    %497 = vmatprep.subr.mxu0 0.0
    %498 = vmatpush1.msra.mxu0 %v112
    %499 = vmatprep.subr.mxu0 0.0
    %500 = vmatpush1.msra.mxu0 %v113
    %501 = vmatprep.subr.mxu0 0.0
    %502 = vmatpush1.msra.mxu0 %v114
    %503 = vmatprep.mubr.f32.mxu0 %v258
    %504 = vmatmul.mubr.f32.gmra.mrb[0].mxu0 %v250
    %v505 = vpop.f32.mrb[0].mxu0
    %v506 = vadd.f32 %v436, %v505
    %v507 = vpop.f32.mrb[0].mxu0
    %508 = vdwg.mxu0
    %509 = vmatprep.subr.mxu0 0.0
    %510 = vmatpush1.msra.mxu0 %v115
    %511 = vmatprep.subr.mxu0 0.0
    %512 = vmatpush1.msra.mxu0 %v116
    %513 = vmatprep.subr.mxu0 0.0
    %514 = vmatpush1.msra.mxu0 %v117
    %515 = vmatprep.subr.mxu0 0.0
    %516 = vmatpush1.msra.mxu0 %v118
    %517 = vmatprep.subr.mxu0 0.0
    %518 = vmatpush1.msra.mxu0 %v119
    %519 = vmatprep.subr.mxu0 0.0
    %520 = vmatpush1.msra.mxu0 %v120
    %521 = vmatprep.subr.mxu0 0.0
    %522 = vmatpush1.msra.mxu0 %v121
    %523 = vmatprep.subr.mxu0 0.0
    %524 = vmatpush1.msra.mxu0 %v122
    %525 = vmatprep.subr.mxu0 0.0
    %526 = vmatpush1.msra.mxu0 %v123
    %527 = vmatprep.subr.mxu0 0.0
    %528 = vmatpush1.msra.mxu0 %v124
    %529 = vmatprep.subr.mxu0 0.0
    %530 = vmatpush1.msra.mxu0 %v125
    %531 = vmatprep.subr.mxu0 0.0
    %532 = vmatpush1.msra.mxu0 %v126
    %533 = vmatprep.subr.mxu0 0.0
    %534 = vmatpush1.msra.mxu0 %v127
    %535 = vmatprep.subr.mxu0 0.0
    %536 = vmatpush1.msra.mxu0 %v128
    %537 = vmatprep.subr.mxu0 0.0
    %538 = vmatpush1.msra.mxu0 %v129
    %539 = vmatprep.subr.mxu0 0.0
    %540 = vmatpush1.msra.mxu0 %v130
    %541 = vmatprep.subr.mxu0 0.0
    %542 = vmatpush1.msra.mxu0 %v131
    %543 = vmatprep.subr.mxu0 0.0
    %544 = vmatpush1.msra.mxu0 %v132
    %545 = vmatprep.subr.mxu0 0.0
    %546 = vmatpush1.msra.mxu0 %v133
    %547 = vmatprep.subr.mxu0 0.0
    %548 = vmatpush1.msra.mxu0 %v134
    %549 = vmatprep.subr.mxu0 0.0
    %550 = vmatpush1.msra.mxu0 %v135
    %551 = vmatprep.subr.mxu0 0.0
    %552 = vmatpush1.msra.mxu0 %v136
    %553 = vmatprep.subr.mxu0 0.0
    %554 = vmatpush1.msra.mxu0 %v137
    %555 = vmatprep.subr.mxu0 0.0
    %556 = vmatpush1.msra.mxu0 %v138
    %557 = vmatprep.subr.mxu0 0.0
    %558 = vmatpush1.msra.mxu0 %v139
    %559 = vmatprep.subr.mxu0 0.0
    %560 = vmatpush1.msra.mxu0 %v140
    %561 = vmatprep.subr.mxu0 0.0
    %562 = vmatpush1.msra.mxu0 %v141
    %563 = vmatprep.subr.mxu0 0.0
    %564 = vmatpush1.msra.mxu0 %v142
    %565 = vmatprep.subr.mxu0 0.0
    %566 = vmatpush1.msra.mxu0 %v143
    %567 = vmatprep.subr.mxu0 0.0
    %568 = vmatpush1.msra.mxu0 %v144
    %569 = vmatprep.subr.mxu0 0.0
    %570 = vmatpush1.msra.mxu0 %v145
    %571 = vmatprep.subr.mxu0 0.0
    %572 = vmatpush1.msra.mxu0 %v146
    %573 = vmatprep.mubr.f32.mxu0 %v259
    %574 = vmatmul.mubr.f32.gmra.mrb[0].mxu0 %v257
    %v575 = vpop.f32.mrb[0].mxu0
    %v576 = vadd.f32 %v506, %v575
    %v577 = vpop.f32.mrb[0].mxu0
    %578 = vdwg.mxu0
    %579 = vmatprep.subr.mxu0 0.0
    %580 = vmatpush1.msra.mxu0 %v147
    %581 = vmatprep.subr.mxu0 0.0
    %582 = vmatpush1.msra.mxu0 %v148
    %583 = vmatprep.subr.mxu0 0.0
    %584 = vmatpush1.msra.mxu0 %v149
    %585 = vmatprep.subr.mxu0 0.0
    %586 = vmatpush1.msra.mxu0 %v150
    %587 = vmatprep.subr.mxu0 0.0
    %588 = vmatpush1.msra.mxu0 %v151
    %589 = vmatprep.subr.mxu0 0.0
    %590 = vmatpush1.msra.mxu0 %v152
    %591 = vmatprep.subr.mxu0 0.0
    %592 = vmatpush1.msra.mxu0 %v153
    %593 = vmatprep.subr.mxu0 0.0
    %594 = vmatpush1.msra.mxu0 %v154
    %595 = vmatprep.subr.mxu0 0.0
    %596 = vmatpush1.msra.mxu0 %v155
    %597 = vmatprep.subr.mxu0 0.0
    %598 = vmatpush1.msra.mxu0 %v156
    %599 = vmatprep.subr.mxu0 0.0
    %600 = vmatpush1.msra.mxu0 %v157
    %601 = vmatprep.subr.mxu0 0.0
    %602 = vmatpush1.msra.mxu0 %v158
    %603 = vmatprep.subr.mxu0 0.0
    %604 = vmatpush1.msra.mxu0 %v159
    %605 = vmatprep.subr.mxu0 0.0
    %606 = vmatpush1.msra.mxu0 %v160
    %607 = vmatprep.subr.mxu0 0.0
    %608 = vmatpush1.msra.mxu0 %v161
    %609 = vmatprep.subr.mxu0 0.0
    %610 = vmatpush1.msra.mxu0 %v162
    %611 = vmatprep.subr.mxu0 0.0
    %612 = vmatpush1.msra.mxu0 %v163
    %613 = vmatprep.subr.mxu0 0.0
    %614 = vmatpush1.msra.mxu0 %v164
    %615 = vmatprep.subr.mxu0 0.0
    %616 = vmatpush1.msra.mxu0 %v165
    %617 = vmatprep.subr.mxu0 0.0
    %618 = vmatpush1.msra.mxu0 %v166
    %619 = vmatprep.subr.mxu0 0.0
    %620 = vmatpush1.msra.mxu0 %v167
    %621 = vmatprep.subr.mxu0 0.0
    %622 = vmatpush1.msra.mxu0 %v168
    %623 = vmatprep.subr.mxu0 0.0
    %624 = vmatpush1.msra.mxu0 %v169
    %625 = vmatprep.subr.mxu0 0.0
    %626 = vmatpush1.msra.mxu0 %v170
    %627 = vmatprep.subr.mxu0 0.0
    %628 = vmatpush1.msra.mxu0 %v171
    %629 = vmatprep.subr.mxu0 0.0
    %630 = vmatpush1.msra.mxu0 %v172
    %631 = vmatprep.subr.mxu0 0.0
    %632 = vmatpush1.msra.mxu0 %v173
    %633 = vmatprep.subr.mxu0 0.0
    %634 = vmatpush1.msra.mxu0 %v174
    %635 = vmatprep.subr.mxu0 0.0
    %636 = vmatpush1.msra.mxu0 %v175
    %637 = vmatprep.subr.mxu0 0.0
    %638 = vmatpush1.msra.mxu0 %v176
    %639 = vmatprep.subr.mxu0 0.0
    %640 = vmatpush1.msra.mxu0 %v177
    %641 = vmatprep.subr.mxu0 0.0
    %642 = vmatpush1.msra.mxu0 %v178
    %643 = vmatprep.mubr.f32.mxu0 %v275
    %644 = vmatmul.mubr.f32.gmra.mrb[0].mxu0 %v267
    %v645 = vpop.f32.mrb[0].mxu0
    %v646 = vadd.f32 %v576, %v645
    %v647 = vpop.f32.mrb[0].mxu0
    %648 = vdwg.mxu0
    %649 = vmatprep.subr.mxu0 0.0
    %650 = vmatpush1.msra.mxu0 %v179
    %651 = vmatprep.subr.mxu0 0.0
    %652 = vmatpush1.msra.mxu0 %v180
    %653 = vmatprep.subr.mxu0 0.0
    %654 = vmatpush1.msra.mxu0 %v181
    %655 = vmatprep.subr.mxu0 0.0
    %656 = vmatpush1.msra.mxu0 %v182
    %657 = vmatprep.subr.mxu0 0.0
    %658 = vmatpush1.msra.mxu0 %v183
    %659 = vmatprep.subr.mxu0 0.0
    %660 = vmatpush1.msra.mxu0 %v184
    %661 = vmatprep.subr.mxu0 0.0
    %662 = vmatpush1.msra.mxu0 %v185
    %663 = vmatprep.subr.mxu0 0.0
    %664 = vmatpush1.msra.mxu0 %v186
    %665 = vmatprep.subr.mxu0 0.0
    %666 = vmatpush1.msra.mxu0 %v187
    %667 = vmatprep.subr.mxu0 0.0
    %668 = vmatpush1.msra.mxu0 %v188
    %669 = vmatprep.subr.mxu0 0.0
    %670 = vmatpush1.msra.mxu0 %v189
    %671 = vmatprep.subr.mxu0 0.0
    %672 = vmatpush1.msra.mxu0 %v190
    %673 = vmatprep.subr.mxu0 0.0
    %674 = vmatpush1.msra.mxu0 %v191
    %675 = vmatprep.subr.mxu0 0.0
    %676 = vmatpush1.msra.mxu0 %v192
    %677 = vmatprep.subr.mxu0 0.0
    %678 = vmatpush1.msra.mxu0 %v193
    %679 = vmatprep.subr.mxu0 0.0
    %680 = vmatpush1.msra.mxu0 %v194
    %681 = vmatprep.subr.mxu0 0.0
    %682 = vmatpush1.msra.mxu0 %v195
    %683 = vmatprep.subr.mxu0 0.0
    %684 = vmatpush1.msra.mxu0 %v196
    %685 = vmatprep.subr.mxu0 0.0
    %686 = vmatpush1.msra.mxu0 %v197
    %687 = vmatprep.subr.mxu0 0.0
    %688 = vmatpush1.msra.mxu0 %v198
    %689 = vmatprep.subr.mxu0 0.0
    %690 = vmatpush1.msra.mxu0 %v199
    %691 = vmatprep.subr.mxu0 0.0
    %692 = vmatpush1.msra.mxu0 %v200
    %693 = vmatprep.subr.mxu0 0.0
    %694 = vmatpush1.msra.mxu0 %v201
    %695 = vmatprep.subr.mxu0 0.0
    %696 = vmatpush1.msra.mxu0 %v202
    %697 = vmatprep.subr.mxu0 0.0
    %698 = vmatpush1.msra.mxu0 %v203
    %699 = vmatprep.subr.mxu0 0.0
    %700 = vmatpush1.msra.mxu0 %v204
    %701 = vmatprep.subr.mxu0 0.0
    %702 = vmatpush1.msra.mxu0 %v205
    %703 = vmatprep.subr.mxu0 0.0
    %704 = vmatpush1.msra.mxu0 %v206
    %705 = vmatprep.subr.mxu0 0.0
    %706 = vmatpush1.msra.mxu0 %v207
    %707 = vmatprep.subr.mxu0 0.0
    %708 = vmatpush1.msra.mxu0 %v208
    %709 = vmatprep.subr.mxu0 0.0
    %710 = vmatpush1.msra.mxu0 %v209
    %711 = vmatprep.subr.mxu0 0.0
    %712 = vmatpush1.msra.mxu0 %v210
    %713 = vmatprep.mubr.f32.mxu0 %v276
    %714 = vmatmul.mubr.f32.gmra.mrb[0].mxu0 %v274
    %v715 = vpop.f32.mrb[0].mxu0
    %v716 = vadd.f32 %v646, %v715
    %v717 = vpop.f32.mrb[0].mxu0
    %718 = vdwg.mxu0
    %719 = vmatprep.subr.mxu0 0.0
    %720 = vmatpush1.msra.mxu0 %v211
    %721 = vmatprep.subr.mxu0 0.0
    %722 = vmatpush1.msra.mxu0 %v212
    %723 = vmatprep.subr.mxu0 0.0
    %724 = vmatpush1.msra.mxu0 %v213
    %725 = vmatprep.subr.mxu0 0.0
    %726 = vmatpush1.msra.mxu0 %v214
    %727 = vmatprep.subr.mxu0 0.0
    %728 = vmatpush1.msra.mxu0 0.0
    %729 = vmatprep.subr.mxu0 0.0
    %730 = vmatpush1.msra.mxu0 0.0
    %731 = vmatprep.subr.mxu0 0.0
    %732 = vmatpush1.msra.mxu0 0.0
    %733 = vmatprep.subr.mxu0 0.0
    %734 = vmatpush1.msra.mxu0 0.0
    %735 = vmatprep.subr.mxu0 0.0
    %736 = vmatpush1.msra.mxu0 0.0
    %737 = vmatprep.subr.mxu0 0.0
    %738 = vmatpush1.msra.mxu0 0.0
    %739 = vmatprep.subr.mxu0 0.0
    %740 = vmatpush1.msra.mxu0 0.0
    %741 = vmatprep.subr.mxu0 0.0
    %742 = vmatpush1.msra.mxu0 0.0
    %743 = vmatprep.subr.mxu0 0.0
    %744 = vmatpush1.msra.mxu0 0.0
    %745 = vmatprep.subr.mxu0 0.0
    %746 = vmatpush1.msra.mxu0 0.0
    %747 = vmatprep.subr.mxu0 0.0
    %748 = vmatpush1.msra.mxu0 0.0
    %749 = vmatprep.subr.mxu0 0.0
    %750 = vmatpush1.msra.mxu0 0.0
    %751 = vmatprep.subr.mxu0 0.0
    %752 = vmatpush1.msra.mxu0 0.0
    %753 = vmatprep.subr.mxu0 0.0
    %754 = vmatpush1.msra.mxu0 0.0
    %755 = vmatprep.subr.mxu0 0.0
    %756 = vmatpush1.msra.mxu0 0.0
    %757 = vmatprep.subr.mxu0 0.0
    %758 = vmatpush1.msra.mxu0 0.0
    %759 = vmatprep.subr.mxu0 0.0
    %760 = vmatpush1.msra.mxu0 0.0
    %761 = vmatprep.subr.mxu0 0.0
    %762 = vmatpush1.msra.mxu0 0.0
    %763 = vmatprep.subr.mxu0 0.0
    %764 = vmatpush1.msra.mxu0 0.0
    %765 = vmatprep.subr.mxu0 0.0
    %766 = vmatpush1.msra.mxu0 0.0
    %767 = vmatprep.subr.mxu0 0.0
    %768 = vmatpush1.msra.mxu0 0.0
    %769 = vmatprep.subr.mxu0 0.0
    %770 = vmatpush1.msra.mxu0 0.0
    %771 = vmatprep.subr.mxu0 0.0
    %772 = vmatpush1.msra.mxu0 0.0
    %773 = vmatprep.subr.mxu0 0.0
    %774 = vmatpush1.msra.mxu0 0.0
    %775 = vmatprep.subr.mxu0 0.0
    %776 = vmatpush1.msra.mxu0 0.0
    %777 = vmatprep.subr.mxu0 0.0
    %778 = vmatpush1.msra.mxu0 0.0
    %779 = vmatprep.subr.mxu0 0.0
    %780 = vmatpush1.msra.mxu0 0.0
    %781 = vmatprep.subr.mxu0 0.0
    %782 = vmatpush1.msra.mxu0 0.0
    %783 = vmatprep.mubr.f32.mxu0 0.0
    %784 = vmatmul.mubr.f32.gmra.mrb[0].mxu0 %v297
    %v785 = vpop.f32.mrb[0].mxu0
    %v786 = vadd.f32 %v716, %v785
    %v787 = vpop.f32.mrb[0].mxu0
    %788 = vdwg.mxu0
    %789 = vst [vmem:[#allocation2] sm:$0x3] %v786
    // Predicated region
    $region14: #{cnn_forward.5} parent=1 // pred_check
      _
    $region15: #{cnn_forward.5} parent=1 // pred_check_branch
      %791 = sbr.rel (0) target = $region17
    $region16: #{cnn_forward.5} parent=1 // pred_region
      %s793 = ssub.s32 32, 32
      %794 = vsyncadd [#allocation3], %s793
      %s796 = sshll.u32 [#allocation2], 4
      %s797 = int_to_ptr.vmem [resolvable:$true] %s796
      %799 = dma.vmem_to_hbm [thread:$0]  %s797, 32, %s3, [#allocation3]
    $region17: #{cnn_forward.5} parent=1 // pred_fallthru
      _
    // Predicated region
    $region18: #{cnn_forward.5} parent=1 // pred_check
      _
    $region19: #{cnn_forward.5} parent=1 // pred_check_branch
      %801 = sbr.rel (0) target = $region21
    $region20: #{cnn_forward.5} parent=1 // pred_region
      %802 = dma.done [#allocation3], 32
    $region21: #{cnn_forward.5} parent=1 // pred_fallthru
      _
    %803 = vsyncpa [#allocation3], 1

</llo_original>
